<compile_context>
chip_gen: v7x
topology: tpu7x:2x2x1
jax: 0.10.0
libtpu: 0.0.40
codegen_flags: <defaults>
</compile_context>

<pallas_src>
import functools

import jax
import jax.numpy as jnp
from jax.experimental import pallas as pl
from jax.experimental.pallas import tpu as pltpu


def _leaky_relu(v, slope=0.1):
    return jnp.where(v >= 0, v, slope * v)


def _round_up(x, m):
    return (x + m - 1) // m * m


# ---------------------------------------------------------------------------
# Kernels
# ---------------------------------------------------------------------------
def _linear_kernel(x_ref, w_ref, b_ref, o_ref):
    # h = x @ Wpre + bpre   (tiny contraction dim; kept in f32)
    o_ref[...] = (
        jnp.dot(x_ref[...], w_ref[...], preferred_element_type=jnp.float32)
        + b_ref[...]
    )


def _gcn_layer_kernel(adj_ref, hk_ref, hi_ref, w_ref, b_ref, out_ref, acc_ref):
    # grid = (node-row tiles i, adjacency contraction tiles k); k is last.
    k = pl.program_id(1)

    @pl.when(k == 0)
    def _():
        acc_ref[...] = jnp.zeros_like(acc_ref)

    # acc += A_hat[i, k] @ h[k]   (bf16 operands, f32 accumulation on the MXU)
    acc_ref[...] += jnp.dot(
        adj_ref[...], hk_ref[...], preferred_element_type=jnp.float32
    )

    @pl.when(k == pl.num_programs(1) - 1)
    def _():
        # (A_hat @ h) @ W + b, then LeakyReLU(0.1) + residual, fused epilogue.
        z = (
            jnp.dot(
                acc_ref[...].astype(jnp.bfloat16),
                w_ref[...],
                preferred_element_type=jnp.float32,
            )
            + b_ref[...]
        )
        out_ref[...] = hi_ref[...] + _leaky_relu(z)


# ---------------------------------------------------------------------------
# pallas_call wrappers
# ---------------------------------------------------------------------------
def _preprocess_call(x_pad, w_pad, b_pad, *, tm):
    n_pad, in_dim = x_pad.shape
    f_pad = w_pad.shape[1]
    return pl.pallas_call(
        _linear_kernel,
        out_shape=jax.ShapeDtypeStruct((n_pad, f_pad), jnp.float32),
        grid=(n_pad // tm,),
        in_specs=[
            pl.BlockSpec((tm, in_dim), lambda i: (i, 0)),
            pl.BlockSpec((in_dim, f_pad), lambda i: (0, 0)),
            pl.BlockSpec((1, f_pad), lambda i: (0, 0)),
        ],
        out_specs=pl.BlockSpec((tm, f_pad), lambda i: (i, 0)),
        compiler_params=pltpu.CompilerParams(dimension_semantics=("parallel",)),
    )(x_pad, w_pad, b_pad)


def _gcn_layer_call(adj_bf16, h_f32, w_bf16, b_f32, *, tm, tk):
    n_pad = adj_bf16.shape[0]
    f_pad = h_f32.shape[1]
    grid = (n_pad // tm, n_pad // tk)
    h_bf16 = h_f32.astype(jnp.bfloat16)  # bf16 feed for the contraction operand

    flops = 2 * n_pad * n_pad * f_pad + 2 * n_pad * f_pad * f_pad
    bytes_accessed = (
        adj_bf16.size * 2                 # adjacency streamed once (bf16)
        + h_bf16.size * 2 * grid[0]       # contraction view reloaded per row tile
        + h_f32.size * 4                  # residual view
        + w_bf16.size * 2
        + b_f32.size * 4
        + n_pad * f_pad * 4               # output
    )

    return pl.pallas_call(
        _gcn_layer_kernel,
        out_shape=jax.ShapeDtypeStruct((n_pad, f_pad), jnp.float32),
        grid=grid,
        in_specs=[
            pl.BlockSpec((tm, tk), lambda i, k: (i, k)),        # A_hat tile (bf16)
            pl.BlockSpec((tk, f_pad), lambda i, k: (k, 0)),     # h contraction view (bf16)
            pl.BlockSpec((tm, f_pad), lambda i, k: (i, 0)),     # h residual view (f32)
            pl.BlockSpec((f_pad, f_pad), lambda i, k: (0, 0)),  # W (bf16)
            pl.BlockSpec((1, f_pad), lambda i, k: (0, 0)),      # b (f32)
        ],
        out_specs=pl.BlockSpec((tm, f_pad), lambda i, k: (i, 0)),
        scratch_shapes=[pltpu.VMEM((tm, f_pad), jnp.float32)],
        compiler_params=pltpu.CompilerParams(
            dimension_semantics=("parallel", "arbitrary")
        ),
        cost_estimate=pl.CostEstimate(
            flops=int(flops), transcendentals=0, bytes_accessed=int(bytes_accessed)
        ),
    )(adj_bf16, h_bf16, h_f32, w_bf16, b_f32)


# ---------------------------------------------------------------------------
# Plain-JAX glue: adjacency construction, padding, parameter init
# ---------------------------------------------------------------------------
def _normalized_adjacency_f32(edge_index, num_nodes):
    """Dense A_hat = D^-1/2 (A + I) D^-1/2 (PyG gcn_norm convention).

    Duplicate edges are scatter-ADDed and self-loops are only added for nodes
    that lack one (add_remaining_self_loops), matching GCNConv defaults."""
    src, dst = edge_index[0], edge_index[1]
    a = jnp.zeros((num_nodes, num_nodes), jnp.float32)
    a = a.at[dst, src].add(1.0)  # messages flow source -> target
    has_self = jnp.diagonal(a) > 0
    a = a + jnp.diag(jnp.where(has_self, 0.0, 1.0))
    deg = a.sum(axis=1)
    d_inv_sqrt = jnp.where(deg > 0, 1.0 / jnp.sqrt(deg), 0.0)
    return d_inv_sqrt[:, None] * a * d_inv_sqrt[None, :]


def _pick_tiles(num_nodes, max_tile):
    n_pad = _round_up(num_nodes, 8)
    if n_pad <= max_tile:
        return n_pad, n_pad, n_pad  # single tile; full-array block is legal
    t = max(128, (max_tile // 128) * 128)  # lane-aligned contraction tile
    n_pad = _round_up(n_pad, t)
    return n_pad, t, t


def _pad_to(a, rows, cols, dtype):
    out = jnp.zeros((rows, cols), dtype)
    return out.at[: a.shape[0], : a.shape[1]].set(a.astype(dtype))


def init_params(key, input_size, features_size):
    ks = jax.random.split(key, 8)
    s_pre = 1.0 / jnp.sqrt(jnp.float32(input_size))
    s_f = 1.0 / jnp.sqrt(jnp.float32(features_size))
    # All weights stored pre-transposed as [in, out] so kernels do h @ W.
    return {
        "wpre": jax.random.uniform(ks[0], (input_size, features_size), jnp.float32, -s_pre, s_pre),
        "bpre": jax.random.uniform(ks[1], (1, features_size), jnp.float32, -s_pre, s_pre),
        "w1": jax.random.uniform(ks[2], (features_size, features_size), jnp.float32, -s_f, s_f),
        "b1": jax.random.uniform(ks[3], (1, features_size), jnp.float32, -s_f, s_f),
        "w2": jax.random.uniform(ks[4], (features_size, features_size), jnp.float32, -s_f, s_f),
        "b2": jax.random.uniform(ks[5], (1, features_size), jnp.float32, -s_f, s_f),
        "w3": jax.random.uniform(ks[6], (features_size, features_size), jnp.float32, -s_f, s_f),
        "b3": jax.random.uniform(ks[7], (1, features_size), jnp.float32, -s_f, s_f),
    }
    # TODO(synk): conv4 exists in __init__ of the PyTorch module but is never
    # used in forward, so it has no parameters / kernel here.


# ---------------------------------------------------------------------------
# Forward
# ---------------------------------------------------------------------------
def first_encoder_forward(x, edge_index, params, *, max_tile=512):
    num_nodes, in_dim = x.shape
    feat = params["wpre"].shape[1]
    f_pad = _round_up(feat, 128)          # lane-dense feature dim
    n_pad, tm, tk = _pick_tiles(num_nodes, max_tile)

    adj = _normalized_adjacency_f32(edge_index, num_nodes)
    adj_bf16 = _pad_to(adj, n_pad, n_pad, jnp.bfloat16)

    x_pad = _pad_to(x, n_pad, in_dim, jnp.float32)
    wpre = _pad_to(params["wpre"], in_dim, f_pad, jnp.float32)
    bpre = _pad_to(params["bpre"], 1, f_pad, jnp.float32)

    h = _preprocess_call(x_pad, wpre, bpre, tm=tm)
    for idx in ("1", "2", "3"):
        w = _pad_to(params["w" + idx], f_pad, f_pad, jnp.bfloat16)
        b = _pad_to(params["b" + idx], 1, f_pad, jnp.float32)
        h = _gcn_layer_call(adj_bf16, h, w, b, tm=tm, tk=tk)

    return h[:num_nodes, :feat]


def first_encoder_reference(x, edge_index, params):
    """Pure-JAX f32 reference matching the PyTorch forward semantics."""
    adj = _normalized_adjacency_f32(edge_index, x.shape[0])
    h = x @ params["wpre"] + params["bpre"]
    for idx in ("1", "2", "3"):
        z = adj @ (h @ params["w" + idx]) + params["b" + idx]
        h = h + _leaky_relu(z)
    return h


if __name__ == "__main__":
    # Small shapes consistent with the module: N nodes, input_size features
    # projected to features_size.  N=200 with max_tile=128 exercises a real
    # (2, 2) grid with multi-step accumulation.
    num_nodes = 200
    input_size = 16
    features_size = 32

    key = jax.random.PRNGKey(0)
    kx, kp = jax.random.split(key)

    x = jax.random.normal(kx, (num_nodes, input_size), jnp.float32)
    # simple ring graph (both directions), int32 [2, E]
    src = jnp.arange(num_nodes, dtype=jnp.int32)
    dst = (src + 1) % num_nodes
    edge_index = jnp.stack(
        [jnp.concatenate([src, dst]), jnp.concatenate([dst, src])], axis=0
    )

    params = init_params(kp, input_size, features_size)

    fwd = jax.jit(functools.partial(first_encoder_forward, max_tile=128))
    out = fwd(x, edge_index, params)
    out = jax.block_until_ready(out)

    ref = first_encoder_reference(x, edge_index, params)
    assert out.shape == (num_nodes, features_size)
    max_err = float(jnp.max(jnp.abs(out - ref)))
    # bf16 MXU operands with f32 accumulation -> slightly looser tolerance
    assert jnp.allclose(out, ref, rtol=3e-2, atol=3e-2), f"max abs err {max_err}"

    print("KERNEL_OK")
</pallas_src>

<mosaic_0001>
module attributes {stable_mosaic.version = 11 : i64} {
  func.func private @main(%arg0: i32) attributes {dimension_semantics = [#tpu.dimension_semantics<core_parallel>], iteration_bounds = array<i64: 2>, tpu.core_type = #tpu.core_type<sc_scalar_subcore>, window_params = []} {
    return
  }
}

module attributes {stable_mosaic.version = 11 : i64} {
  func.func private @main(%arg0: i32) attributes {dimension_semantics = [#tpu.dimension_semantics<core_parallel>], iteration_bounds = array<i64: 2>, tpu.core_type = #tpu.core_type<sc_scalar_subcore>, window_params = []} {
    return
  }
}

module attributes {stable_mosaic.version = 11 : i64} {
  func.func @_linear_kernel(%arg0: i32, %arg1: memref<128x16xf32, #tpu.memory_space<vmem>>, %arg2: memref<16x128xf32, #tpu.memory_space<vmem>>, %arg3: memref<1x128xf32, #tpu.memory_space<vmem>>, %arg4: memref<128x128xf32, #tpu.memory_space<vmem>>) attributes {dimension_semantics = [#tpu.dimension_semantics<parallel>], iteration_bounds = array<i64: 2>, scalar_prefetch = 0 : i64, scratch_operands = 0 : i64, tpu.core_type = #tpu.core_type<tc>, window_params = [{transform_indices = @transform_0, window_bounds = array<i64: 128, 16>}, {pipeline_mode = #tpu.pipeline_mode<synchronous>, transform_indices = @transform_1, window_bounds = array<i64: 16, 128>}, {pipeline_mode = #tpu.pipeline_mode<synchronous>, transform_indices = @transform_2, window_bounds = array<i64: 1, 128>}, {transform_indices = @transform_3, window_bounds = array<i64: 128, 128>}]} {
    %c0 = arith.constant 0 : index
    %c0_0 = arith.constant 0 : index
    %0 = vector.load %arg1[%c0, %c0_0] : memref<128x16xf32, #tpu.memory_space<vmem>>, vector<128x16xf32>
    %c0_1 = arith.constant 0 : index
    %c0_2 = arith.constant 0 : index
    %1 = vector.load %arg2[%c0_1, %c0_2] : memref<16x128xf32, #tpu.memory_space<vmem>>, vector<16x128xf32>
    %cst = arith.constant dense<0.000000e+00> : vector<128x128xf32>
    %2 = tpu.matmul %0, %1, %cst {dimension_numbers = #tpu.dot_dimension_numbers<[1], [0], [0], [1], [0, 0, 1, 1], [], []>} : vector<128x16xf32>, vector<16x128xf32>, vector<128x128xf32> -> vector<128x128xf32>
    %c0_3 = arith.constant 0 : index
    %c0_4 = arith.constant 0 : index
    %3 = vector.load %arg3[%c0_3, %c0_4] : memref<1x128xf32, #tpu.memory_space<vmem>>, vector<1x128xf32>
    %4 = vector.broadcast %3 : vector<1x128xf32> to vector<128x128xf32>
    %5 = arith.addf %2, %4 : vector<128x128xf32>
    %c0_5 = arith.constant 0 : index
    %c0_6 = arith.constant 0 : index
    %6 = vector.load %arg4[%c0_5, %c0_6] : memref<128x128xf32, #tpu.memory_space<vmem>>, vector<128x128xf32>
    tpu.vector_store %arg4[%c0_5, %c0_6], %5 {strides = array<i32>} : memref<128x128xf32, #tpu.memory_space<vmem>>, vector<128x128xf32>,
    return
  }
  func.func @transform_0(%arg0: i32) -> (i32, i32) {
    %c0_i32 = arith.constant 0 : i32
    %c0_i32_0 = arith.constant 0 : i32
    return %arg0, %c0_i32 : i32, i32
  }
  func.func @transform_1(%arg0: i32) -> (i32, i32) {
    %c0_i32 = arith.constant 0 : i32
    %c0_i32_0 = arith.constant 0 : i32
    %c0_i32_1 = arith.constant 0 : i32
    return %c0_i32, %c0_i32_0 : i32, i32
  }
  func.func @transform_2(%arg0: i32) -> (i32, i32) {
    %c0_i32 = arith.constant 0 : i32
    %c0_i32_0 = arith.constant 0 : i32
    %c0_i32_1 = arith.constant 0 : i32
    return %c0_i32, %c0_i32_0 : i32, i32
  }
  func.func @transform_3(%arg0: i32) -> (i32, i32) {
    %c0_i32 = arith.constant 0 : i32
    %c0_i32_0 = arith.constant 0 : i32
    return %arg0, %c0_i32 : i32, i32
  }
}

module attributes {stable_mosaic.version = 11 : i64} {
  func.func @_gcn_layer_kernel(%arg0: i32, %arg1: i32, %arg2: memref<128x128xbf16, #tpu.memory_space<vmem>>, %arg3: memref<128x128xbf16, #tpu.memory_space<vmem>>, %arg4: memref<128x128xf32, #tpu.memory_space<vmem>>, %arg5: memref<128x128xbf16, #tpu.memory_space<vmem>>, %arg6: memref<1x128xf32, #tpu.memory_space<vmem>>, %arg7: memref<128x128xf32, #tpu.memory_space<vmem>>, %arg8: memref<128x128xf32, #tpu.memory_space<vmem>>) attributes {dimension_semantics = [#tpu.dimension_semantics<parallel>, #tpu.dimension_semantics<arbitrary>], iteration_bounds = array<i64: 2, 2>, scalar_prefetch = 0 : i64, scratch_operands = 1 : i64, tpu.core_type = #tpu.core_type<tc>, window_params = [{transform_indices = @transform_0, window_bounds = array<i64: 128, 128>}, {transform_indices = @transform_1, window_bounds = array<i64: 128, 128>}, {transform_indices = @transform_2, window_bounds = array<i64: 128, 128>}, {pipeline_mode = #tpu.pipeline_mode<synchronous>, transform_indices = @transform_3, window_bounds = array<i64: 128, 128>}, {pipeline_mode = #tpu.pipeline_mode<synchronous>, transform_indices = @transform_4, window_bounds = array<i64: 1, 128>}, {transform_indices = @transform_5, window_bounds = array<i64: 128, 128>}]} {
    %c0_i32 = arith.constant 0 : i32
    %0 = arith.cmpi eq, %arg1, %c0_i32 : i32
    %1 = arith.extui %0 : i1 to i32
    %c0_i32_0 = arith.constant 0 : i32
    %2 = arith.cmpi ne, %1, %c0_i32_0 : i32
    scf.if %2 {
      %cst_9 = arith.constant 0.000000e+00 : f32
      %12 = vector.broadcast %cst_9 : f32 to vector<128x128xf32>
      %c0_10 = arith.constant 0 : index
      %c0_11 = arith.constant 0 : index
      %13 = vector.load %arg8[%c0_10, %c0_11] : memref<128x128xf32, #tpu.memory_space<vmem>>, vector<128x128xf32>
      tpu.vector_store %arg8[%c0_10, %c0_11], %12 {strides = array<i32>} : memref<128x128xf32, #tpu.memory_space<vmem>>, vector<128x128xf32>,
    } else {
    }
    %c0 = arith.constant 0 : index
    %c0_1 = arith.constant 0 : index
    %3 = vector.load %arg8[%c0, %c0_1] : memref<128x128xf32, #tpu.memory_space<vmem>>, vector<128x128xf32>
    %c0_2 = arith.constant 0 : index
    %c0_3 = arith.constant 0 : index
    %4 = vector.load %arg2[%c0_2, %c0_3] : memref<128x128xbf16, #tpu.memory_space<vmem>>, vector<128x128xbf16>
    %c0_4 = arith.constant 0 : index
    %c0_5 = arith.constant 0 : index
    %5 = vector.load %arg3[%c0_4, %c0_5] : memref<128x128xbf16, #tpu.memory_space<vmem>>, vector<128x128xbf16>
    %cst = arith.constant dense<0.000000e+00> : vector<128x128xf32>
    %6 = tpu.matmul %4, %5, %cst {dimension_numbers = #tpu.dot_dimension_numbers<[1], [0], [0], [1], [0, 0, 1, 1], [], []>} : vector<128x128xbf16>, vector<128x128xbf16>, vector<128x128xf32> -> vector<128x128xf32>
    %7 = arith.addf %3, %6 : vector<128x128xf32>
    %c0_6 = arith.constant 0 : index
    %c0_7 = arith.constant 0 : index
    %8 = vector.load %arg8[%c0_6, %c0_7] : memref<128x128xf32, #tpu.memory_space<vmem>>, vector<128x128xf32>
    tpu.vector_store %arg8[%c0_6, %c0_7], %7 {strides = array<i32>} : memref<128x128xf32, #tpu.memory_space<vmem>>, vector<128x128xf32>,
    %c1_i32 = arith.constant 1 : i32
    %9 = arith.cmpi eq, %arg1, %c1_i32 : i32
    %10 = arith.extui %9 : i1 to i32
    %c0_i32_8 = arith.constant 0 : i32
    %11 = arith.cmpi ne, %10, %c0_i32_8 : i32
    scf.if %11 {
      %c0_9 = arith.constant 0 : index
      %c0_10 = arith.constant 0 : index
      %12 = vector.load %arg8[%c0_9, %c0_10] : memref<128x128xf32, #tpu.memory_space<vmem>>, vector<128x128xf32>
      %13 = arith.truncf %12 : vector<128x128xf32> to vector<128x128xbf16>
      %c0_11 = arith.constant 0 : index
      %c0_12 = arith.constant 0 : index
      %14 = vector.load %arg5[%c0_11, %c0_12] : memref<128x128xbf16, #tpu.memory_space<vmem>>, vector<128x128xbf16>
      %cst_13 = arith.constant dense<0.000000e+00> : vector<128x128xf32>
      %15 = tpu.matmul %13, %14, %cst_13 {dimension_numbers = #tpu.dot_dimension_numbers<[1], [0], [0], [1], [0, 0, 1, 1], [], []>} : vector<128x128xbf16>, vector<128x128xbf16>, vector<128x128xf32> -> vector<128x128xf32>
      %c0_14 = arith.constant 0 : index
      %c0_15 = arith.constant 0 : index
      %16 = vector.load %arg6[%c0_14, %c0_15] : memref<1x128xf32, #tpu.memory_space<vmem>>, vector<1x128xf32>
      %17 = vector.broadcast %16 : vector<1x128xf32> to vector<128x128xf32>
      %18 = arith.addf %15, %17 : vector<128x128xf32>
      %c0_16 = arith.constant 0 : index
      %c0_17 = arith.constant 0 : index
      %19 = vector.load %arg4[%c0_16, %c0_17] : memref<128x128xf32, #tpu.memory_space<vmem>>, vector<128x128xf32>
      %cst_18 = arith.constant 0.000000e+00 : f32
      %20 = vector.broadcast %cst_18 : f32 to vector<128x128xf32>
      %21 = arith.cmpf oge, %18, %20 : vector<128x128xf32>
      %cst_19 = arith.constant 1.000000e-01 : f32
      %22 = vector.broadcast %cst_19 : f32 to vector<128x128xf32>
      %23 = arith.mulf %22, %18 : vector<128x128xf32>
      %24 = arith.select %21, %18, %23 : vector<128x128xi1>, vector<128x128xf32>
      %25 = arith.addf %19, %24 : vector<128x128xf32>
      %c0_20 = arith.constant 0 : index
      %c0_21 = arith.constant 0 : index
      %26 = vector.load %arg7[%c0_20, %c0_21] : memref<128x128xf32, #tpu.memory_space<vmem>>, vector<128x128xf32>
      tpu.vector_store %arg7[%c0_20, %c0_21], %25 {strides = array<i32>} : memref<128x128xf32, #tpu.memory_space<vmem>>, vector<128x128xf32>,
    } else {
    }
    return
  }
  func.func @transform_0(%arg0: i32, %arg1: i32) -> (i32, i32) {
    %c0_i32 = arith.constant 0 : i32
    return %arg0, %arg1 : i32, i32
  }
  func.func @transform_1(%arg0: i32, %arg1: i32) -> (i32, i32) {
    %c0_i32 = arith.constant 0 : i32
    %c0_i32_0 = arith.constant 0 : i32
    return %arg1, %c0_i32 : i32, i32
  }
  func.func @transform_2(%arg0: i32, %arg1: i32) -> (i32, i32) {
    %c0_i32 = arith.constant 0 : i32
    %c0_i32_0 = arith.constant 0 : i32
    return %arg0, %c0_i32 : i32, i32
  }
  func.func @transform_3(%arg0: i32, %arg1: i32) -> (i32, i32) {
    %c0_i32 = arith.constant 0 : i32
    %c0_i32_0 = arith.constant 0 : i32
    %c0_i32_1 = arith.constant 0 : i32
    return %c0_i32, %c0_i32_0 : i32, i32
  }
  func.func @transform_4(%arg0: i32, %arg1: i32) -> (i32, i32) {
    %c0_i32 = arith.constant 0 : i32
    %c0_i32_0 = arith.constant 0 : i32
    %c0_i32_1 = arith.constant 0 : i32
    return %c0_i32, %c0_i32_0 : i32, i32
  }
  func.func @transform_5(%arg0: i32, %arg1: i32) -> (i32, i32) {
    %c0_i32 = arith.constant 0 : i32
    %c0_i32_0 = arith.constant 0 : i32
    return %arg0, %c0_i32 : i32, i32
  }
}

</mosaic_0001>

<llo_original>
// kernel: first_encoder_forward.4
$region0: #{first_encoder_forward.4}
  #allocation0 [shape = 'u32[]', space=smem, size = 0x4, offset = 0x4, fixed_abs, tag = 'smem constant byte address 0x4 - core index']
  #allocation1 [shape = 'u32[144,128]{1,0:T(1,128)}', space=vmem, size = 0x12000, scoped, tag = 'internal scratch']
  %s0 = inlined_call_operand.vmem [shape: f32[256,16], index: 0, kind: input, shape index: {}]
  %s1 = inlined_call_operand.vmem [shape: f32[16,128], index: 1, kind: input, shape index: {}]
  %s2 = inlined_call_operand.vmem [shape: f32[1,128], index: 2, kind: input, shape index: {}]
  %s3 = inlined_call_operand.vmem [shape: f32[256,128], index: 3, kind: output, shape index: {}]
  %s4 = sld [smem:[#allocation0]]
  $region45: #{first_encoder_forward.4} parent=0
    _
  %s6 = ssub.s32 1, %s4
  %s7 = scalar_select 0, %s6, %s4
  loop: start=0, step=1, limit=4
  $region2: #{first_encoder_forward.4} parent=0 // loop_pre_header
    _
  $region3: #{first_encoder_forward.4} parent=0 // loop_header
    %s9 = sphi 0, %s13
    %p10 = scmp.ge.s32.totalorder %s9, 4
    %s19 = sphi 0, %s21
    %s22 = sphi 0, %s19
    %s23 = sphi 0, %s22
    %s39 = sphi 0, %s23
    %s43 = sphi 0, %s43
    %s45 = sphi 0, %s43
    %s46 = sphi 0, %s45
    %s60 = sphi 0, %s46
    %s64 = sphi 0, %s64
    %s66 = sphi 0, %s64
    %s67 = sphi 0, %s66
    %s81 = sphi 0, %s67
    %s87 = sphi 0, %s89
    %s90 = sphi 0, %s87
    %s91 = sphi 0, %s90
    %s107 = sphi 0, %s91
  $region4: #{first_encoder_forward.4} parent=0 // loop_header_branch
    %12 = sbr.rel (%p10) target = $region8
  $region5: #{first_encoder_forward.4} parent=0 // loop_body
    %s14 = ssub.s32 %s9, 1
    %s15 = ssub.s32 %s9, 2
    %s16 = sadd.s32 %s9, 1
    %s17 = ssub.s32 %s9, %s16
    %p18 = scmp.eq.s32.totalorder %s17, 0
    %s20 = sadd.s32 %s19, 1
    %s21 = scalar_select %p18, %s19, %s20
    %p24 = pneg %p18
    %p25 = scmp.eq.s32.totalorder %s9, 1
    %p26 = por %p24, %p25
    %p27 = scmp.ne.s32.totalorder %s19, %s22
    %p28 = scmp.eq.s32.totalorder %s9, 0
    %p29 = por %p27, %p28
    %p30 = scmp.ne.s32.totalorder %s19, %s22
    %p31 = scmp.eq.s32.totalorder %s14, 1
    %p32 = por %p30, %p31
    %p33 = scmp.ne.s32.totalorder %s22, %s23
    %p34 = scmp.eq.s32.totalorder %s14, 0
    %p35 = por %p33, %p34
    %p36 = scmp.ne.s32.totalorder %s22, %s23
    %p37 = scmp.eq.s32.totalorder %s15, 1
    %p38 = por %p36, %p37
    %p40 = scmp.ne.s32.totalorder %s23, %s39
    %p41 = scmp.eq.s32.totalorder %s15, 0
    %p42 = por %p40, %p41
    %s44 = sadd.s32 %s43, 1
    %p47 = scmp.eq.s32.totalorder %s9, 1
    %p48 = scmp.ne.s32.totalorder %s43, %s45
    %p49 = scmp.eq.s32.totalorder %s9, 0
    %p50 = por %p48, %p49
    %p51 = scmp.ne.s32.totalorder %s43, %s45
    %p52 = scmp.eq.s32.totalorder %s14, 1
    %p53 = por %p51, %p52
    %p54 = scmp.ne.s32.totalorder %s45, %s46
    %p55 = scmp.eq.s32.totalorder %s14, 0
    %p56 = por %p54, %p55
    %p57 = scmp.ne.s32.totalorder %s45, %s46
    %p58 = scmp.eq.s32.totalorder %s15, 1
    %p59 = por %p57, %p58
    %p61 = scmp.ne.s32.totalorder %s46, %s60
    %p62 = scmp.eq.s32.totalorder %s15, 0
    %p63 = por %p61, %p62
    %s65 = sadd.s32 %s64, 1
    %p68 = scmp.eq.s32.totalorder %s9, 1
    %p69 = scmp.ne.s32.totalorder %s64, %s66
    %p70 = scmp.eq.s32.totalorder %s9, 0
    %p71 = por %p69, %p70
    %p72 = scmp.ne.s32.totalorder %s64, %s66
    %p73 = scmp.eq.s32.totalorder %s14, 1
    %p74 = por %p72, %p73
    %p75 = scmp.ne.s32.totalorder %s66, %s67
    %p76 = scmp.eq.s32.totalorder %s14, 0
    %p77 = por %p75, %p76
    %p78 = scmp.ne.s32.totalorder %s66, %s67
    %p79 = scmp.eq.s32.totalorder %s15, 1
    %p80 = por %p78, %p79
    %p82 = scmp.ne.s32.totalorder %s67, %s81
    %p83 = scmp.eq.s32.totalorder %s15, 0
    %p84 = por %p82, %p83
    %s85 = ssub.s32 %s9, %s16
    %p86 = scmp.eq.s32.totalorder %s85, 0
    %s88 = sadd.s32 %s87, 1
    %s89 = scalar_select %p86, %s87, %s88
    %p92 = pneg %p86
    %p93 = scmp.eq.s32.totalorder %s9, 1
    %p94 = por %p92, %p93
    %p95 = scmp.ne.s32.totalorder %s87, %s90
    %p96 = scmp.eq.s32.totalorder %s9, 0
    %p97 = por %p95, %p96
    %p98 = scmp.ne.s32.totalorder %s87, %s90
    %p99 = scmp.eq.s32.totalorder %s14, 1
    %p100 = por %p98, %p99
    %p101 = scmp.ne.s32.totalorder %s90, %s91
    %p102 = scmp.eq.s32.totalorder %s14, 0
    %p103 = por %p101, %p102
    %p104 = scmp.ne.s32.totalorder %s90, %s91
    %p105 = scmp.eq.s32.totalorder %s15, 1
    %p106 = por %p104, %p105
    %p108 = scmp.ne.s32.totalorder %s91, %s107
    %p109 = scmp.eq.s32.totalorder %s15, 0
    %p110 = por %p108, %p109
    %p111 = scmp.le.s32.totalorder 1, %s9
    %p112 = scmp.lt.s32.totalorder %s9, 3
    %p113 = pnand %p111, %p112
    %p114 = pneg %p113
    // Predicated region
    $region9: #{first_encoder_forward.4} parent=5 // pred_check
      _
    $region10: #{first_encoder_forward.4} parent=5 // pred_check_branch
      %116 = sbr.rel (%p113) target = $region12
    $region11: #{first_encoder_forward.4} parent=5 // pred_region
      %s117 = ssub.s32 %s9, 1
      // Predicated region
      $region13: #{first_encoder_forward.4} parent=11 // pred_check
        %p118 = pneg %p56
      $region14: #{first_encoder_forward.4} parent=11 // pred_check_branch
        %120 = sbr.rel (%p118) target = $region16
      $region15: #{first_encoder_forward.4} parent=11 // pred_region
        _
      $region16: #{first_encoder_forward.4} parent=11 // pred_fallthru
        _
      // Predicated region
      $region17: #{first_encoder_forward.4} parent=11 // pred_check
        %p121 = pneg %p77
      $region18: #{first_encoder_forward.4} parent=11 // pred_check_branch
        %123 = sbr.rel (%p121) target = $region20
      $region19: #{first_encoder_forward.4} parent=11 // pred_region
        _
      $region20: #{first_encoder_forward.4} parent=11 // pred_fallthru
        _
    $region12: #{first_encoder_forward.4} parent=5 // pred_fallthru
      _
    %p124 = scmp.lt.s32.totalorder %s9, 2
    // Predicated region
    $region21: #{first_encoder_forward.4} parent=5 // pred_check
      %p125 = pneg %p124
    $region22: #{first_encoder_forward.4} parent=5 // pred_check_branch
      %127 = sbr.rel (%p125) target = $region24
    $region23: #{first_encoder_forward.4} parent=5 // pred_region
      // Predicated region
      $region25: #{first_encoder_forward.4} parent=23 // pred_check
        %p128 = pneg %p29
      $region26: #{first_encoder_forward.4} parent=23 // pred_check_branch
        %130 = sbr.rel (%p128) target = $region28
      $region27: #{first_encoder_forward.4} parent=23 // pred_region
        %s131 = smul.u32 16, %s9
        %p132 = scmp.lt.s32.totalorder %s131, 31
        %s133 = scalar_select %p132, %s131, 31
        %s134 = smul.addr %s133, 8
        %s135 = scalar_lea.vmem %s0, %s134
        %s136 = smul.u32 16, %s9
      $region28: #{first_encoder_forward.4} parent=23 // pred_fallthru
        _
    $region24: #{first_encoder_forward.4} parent=5 // pred_fallthru
      _
    %p137 = scmp.le.s32.totalorder 1, %s9
    %p138 = scmp.lt.s32.totalorder %s9, 3
    %p139 = pnand %p137, %p138
    %p140 = pneg %p139
    // Predicated region
    $region29: #{first_encoder_forward.4} parent=5 // pred_check
      _
    $region30: #{first_encoder_forward.4} parent=5 // pred_check_branch
      %142 = sbr.rel (%p139) target = $region32
    $region31: #{first_encoder_forward.4} parent=5 // pred_region
      %s143 = ssub.s32 %s9, 1
      %s144 = smul.u32 16, %s14
      %p145 = scmp.lt.s32.totalorder %s144, 31
      %s146 = scalar_select %p145, %s144, 31
      %s147 = smul.addr %s146, 8
      %s148 = scalar_lea.vmem %s0, %s147
      %p149 = pneg %p35
      %p150 = pneg %p32
      %p151 = pneg %p56
      %p152 = pneg %p53
      %p153 = pneg %p77
      %p154 = pneg %p74
      %p155 = pneg %p103
      %p156 = pneg %p100
      %s157 = smul.u32 16, %s14
      %p158 = scmp.lt.s32.totalorder %s157, 31
      %s159 = scalar_select %p158, %s157, 31
      %s160 = smul.addr %s159, 8
      %s161 = scalar_lea.vmem %s3, %s160
      %s162 = smul.u32 16, %s14
      %p163 = scmp.lt.s32.totalorder %s162, 31
      %s164 = scalar_select %p163, %s162, 31
      %s165 = smul.addr %s164, 8
      %s166 = scalar_lea.vmem %s0, %s165
      %s167 = smul.u32 16, %s14
      %s168 = smul.u32 16, %s14
      %p169 = scmp.lt.s32.totalorder %s168, 31
      %s170 = scalar_select %p169, %s168, 31
      %s171 = smul.addr %s170, 8
      %s172 = scalar_lea.vmem %s3, %s171
      %s173 = smul.u32 16, %s14
      %v174 = vld [vmem:[%s166] sm:$0xff]
      %v175 = vld [vmem:[%s166 + $0x8] sm:$0xff]
      %v176 = vld [vmem:[%s166 + $0x10] sm:$0xff]
      %v177 = vld [vmem:[%s166 + $0x18] sm:$0xff]
      %v178 = vld [vmem:[%s166 + $0x20] sm:$0xff]
      %v179 = vld [vmem:[%s166 + $0x28] sm:$0xff]
      %v180 = vld [vmem:[%s166 + $0x30] sm:$0xff]
      %v181 = vld [vmem:[%s166 + $0x38] sm:$0xff]
      %v182 = vld [vmem:[%s166 + $0x40] sm:$0xff]
      %v183 = vld [vmem:[%s166 + $0x48] sm:$0xff]
      %v184 = vld [vmem:[%s166 + $0x50] sm:$0xff]
      %v185 = vld [vmem:[%s166 + $0x58] sm:$0xff]
      %v186 = vld [vmem:[%s166 + $0x60] sm:$0xff]
      %v187 = vld [vmem:[%s166 + $0x68] sm:$0xff]
      %v188 = vld [vmem:[%s166 + $0x70] sm:$0xff]
      %v189 = vld [vmem:[%s166 + $0x78] sm:$0xff]
      %v190 = vld [vmem:[%s1] sm:$0xff]
      %v191 = vld [vmem:[%s1 + $0x8] sm:$0xff]
      %v192 = vld [vmem:[%s2] sm:$0x1]
      %v194 = vlaneseq
      %v195 = vshrl.u32 %v194, 7
      %v196 = vsub.s32 0, %v195
      %v197 = vrot.slane %v192, %v196
      %vm199 = vcmask 130048
      %v201 = vsel %vm199, %v174, 0
      %v204 = vsel %vm199, %v175, 0
      %v207 = vsel %vm199, %v176, 0
      %v210 = vsel %vm199, %v177, 0
      %v213 = vsel %vm199, %v178, 0
      %v216 = vsel %vm199, %v179, 0
      %v219 = vsel %vm199, %v180, 0
      %v222 = vsel %vm199, %v181, 0
      %v225 = vsel %vm199, %v182, 0
      %v228 = vsel %vm199, %v183, 0
      %v231 = vsel %vm199, %v184, 0
      %v234 = vsel %vm199, %v185, 0
      %v237 = vsel %vm199, %v186, 0
      %v240 = vsel %vm199, %v187, 0
      %v243 = vsel %vm199, %v188, 0
      %v246 = vsel %vm199, %v189, 0
      %248 = vmatprep.subr.mxu0 0.0
      %249 = vmatpush1.msra.mxu0 %v190
      %250 = vmatprep.subr.mxu0 0.0
      %251 = vmatpush1.msra.mxu0 %v191
      %252 = vmatprep.subr.mxu0 0.0
      %253 = vmatpush1.msra.mxu0 0.0
      %254 = vmatprep.subr.mxu0 0.0
      %255 = vmatpush1.msra.mxu0 0.0
      %256 = vmatprep.subr.mxu0 0.0
      %257 = vmatpush1.msra.mxu0 0.0
      %258 = vmatprep.subr.mxu0 0.0
      %259 = vmatpush1.msra.mxu0 0.0
      %260 = vmatprep.subr.mxu0 0.0
      %261 = vmatpush1.msra.mxu0 0.0
      %262 = vmatprep.subr.mxu0 0.0
      %263 = vmatpush1.msra.mxu0 0.0
      %264 = vmatprep.subr.mxu0 0.0
      %265 = vmatpush1.msra.mxu0 0.0
      %266 = vmatprep.subr.mxu0 0.0
      %267 = vmatpush1.msra.mxu0 0.0
      %268 = vmatprep.subr.mxu0 0.0
      %269 = vmatpush1.msra.mxu0 0.0
      %270 = vmatprep.subr.mxu0 0.0
      %271 = vmatpush1.msra.mxu0 0.0
      %272 = vmatprep.subr.mxu0 0.0
      %273 = vmatpush1.msra.mxu0 0.0
      %274 = vmatprep.subr.mxu0 0.0
      %275 = vmatpush1.msra.mxu0 0.0
      %276 = vmatprep.subr.mxu0 0.0
      %277 = vmatpush1.msra.mxu0 0.0
      %278 = vmatprep.subr.mxu0 0.0
      %279 = vmatpush1.msra.mxu0 0.0
      %280 = vmatprep.subr.mxu0 0.0
      %281 = vmatpush1.msra.mxu0 0.0
      %282 = vmatprep.subr.mxu0 0.0
      %283 = vmatpush1.msra.mxu0 0.0
      %284 = vmatprep.subr.mxu0 0.0
      %285 = vmatpush1.msra.mxu0 0.0
      %286 = vmatprep.subr.mxu0 0.0
      %287 = vmatpush1.msra.mxu0 0.0
      %288 = vmatprep.subr.mxu0 0.0
      %289 = vmatpush1.msra.mxu0 0.0
      %290 = vmatprep.subr.mxu0 0.0
      %291 = vmatpush1.msra.mxu0 0.0
      %292 = vmatprep.subr.mxu0 0.0
      %293 = vmatpush1.msra.mxu0 0.0
      %294 = vmatprep.subr.mxu0 0.0
      %295 = vmatpush1.msra.mxu0 0.0
      %296 = vmatprep.subr.mxu0 0.0
      %297 = vmatpush1.msra.mxu0 0.0
      %298 = vmatprep.subr.mxu0 0.0
      %299 = vmatpush1.msra.mxu0 0.0
      %300 = vmatprep.subr.mxu0 0.0
      %301 = vmatpush1.msra.mxu0 0.0
      %302 = vmatprep.subr.mxu0 0.0
      %303 = vmatpush1.msra.mxu0 0.0
      %304 = vmatprep.subr.mxu0 0.0
      %305 = vmatpush1.msra.mxu0 0.0
      %306 = vmatprep.subr.mxu0 0.0
      %307 = vmatpush1.msra.mxu0 0.0
      %308 = vmatprep.subr.mxu0 0.0
      %309 = vmatpush1.msra.mxu0 0.0
      %310 = vmatprep.subr.mxu0 0.0
      %311 = vmatpush1.msra.mxu0 0.0
      %312 = vmatprep.mubr.f32.mxu0 0.0
      %313 = vmatmul.mubr.f32.gmra.mrb[0].mxu0 %v201
      %v314 = vpop.f32.mrb[0].mxu0
      %v315 = vadd.f32 %v197, %v314
      %v316 = vpop.f32.mrb[0].mxu0
      %317 = vmatprep.mubr.f32.mxu0 0.0
      %318 = vmatmul.mubr.f32.gmra.mrb[0].mxu0 %v204
      %v319 = vpop.f32.mrb[0].mxu0
      %v320 = vadd.f32 %v197, %v319
      %v321 = vpop.f32.mrb[0].mxu0
      %322 = vmatprep.mubr.f32.mxu0 0.0
      %323 = vmatmul.mubr.f32.gmra.mrb[0].mxu0 %v207
      %v324 = vpop.f32.mrb[0].mxu0
      %v325 = vadd.f32 %v197, %v324
      %v326 = vpop.f32.mrb[0].mxu0
      %327 = vmatprep.mubr.f32.mxu0 0.0
      %328 = vmatmul.mubr.f32.gmra.mrb[0].mxu0 %v210
      %v329 = vpop.f32.mrb[0].mxu0
      %v330 = vadd.f32 %v197, %v329
      %v331 = vpop.f32.mrb[0].mxu0
      %332 = vmatprep.mubr.f32.mxu0 0.0
      %333 = vmatmul.mubr.f32.gmra.mrb[0].mxu0 %v213
      %v334 = vpop.f32.mrb[0].mxu0
      %v335 = vadd.f32 %v197, %v334
      %v336 = vpop.f32.mrb[0].mxu0
      %337 = vmatprep.mubr.f32.mxu0 0.0
      %338 = vmatmul.mubr.f32.gmra.mrb[0].mxu0 %v216
      %v339 = vpop.f32.mrb[0].mxu0
      %v340 = vadd.f32 %v197, %v339
      %v341 = vpop.f32.mrb[0].mxu0
      %342 = vmatprep.mubr.f32.mxu0 0.0
      %343 = vmatmul.mubr.f32.gmra.mrb[0].mxu0 %v219
      %v344 = vpop.f32.mrb[0].mxu0
      %v345 = vadd.f32 %v197, %v344
      %v346 = vpop.f32.mrb[0].mxu0
      %347 = vmatprep.mubr.f32.mxu0 0.0
      %348 = vmatmul.mubr.f32.gmra.mrb[0].mxu0 %v222
      %v349 = vpop.f32.mrb[0].mxu0
      %v350 = vadd.f32 %v197, %v349
      %v351 = vpop.f32.mrb[0].mxu0
      %352 = vmatprep.mubr.f32.mxu0 0.0
      %353 = vmatmul.mubr.f32.gmra.mrb[0].mxu0 %v225
      %v354 = vpop.f32.mrb[0].mxu0
      %v355 = vadd.f32 %v197, %v354
      %v356 = vpop.f32.mrb[0].mxu0
      %357 = vmatprep.mubr.f32.mxu0 0.0
      %358 = vmatmul.mubr.f32.gmra.mrb[0].mxu0 %v228
      %v359 = vpop.f32.mrb[0].mxu0
      %v360 = vadd.f32 %v197, %v359
      %v361 = vpop.f32.mrb[0].mxu0
      %362 = vmatprep.mubr.f32.mxu0 0.0
      %363 = vmatmul.mubr.f32.gmra.mrb[0].mxu0 %v231
      %v364 = vpop.f32.mrb[0].mxu0
      %v365 = vadd.f32 %v197, %v364
      %v366 = vpop.f32.mrb[0].mxu0
      %367 = vmatprep.mubr.f32.mxu0 0.0
      %368 = vmatmul.mubr.f32.gmra.mrb[0].mxu0 %v234
      %v369 = vpop.f32.mrb[0].mxu0
      %v370 = vadd.f32 %v197, %v369
      %v371 = vpop.f32.mrb[0].mxu0
      %372 = vmatprep.mubr.f32.mxu0 0.0
      %373 = vmatmul.mubr.f32.gmra.mrb[0].mxu0 %v237
      %v374 = vpop.f32.mrb[0].mxu0
      %v375 = vadd.f32 %v197, %v374
      %v376 = vpop.f32.mrb[0].mxu0
      %377 = vmatprep.mubr.f32.mxu0 0.0
      %378 = vmatmul.mubr.f32.gmra.mrb[0].mxu0 %v240
      %v379 = vpop.f32.mrb[0].mxu0
      %v380 = vadd.f32 %v197, %v379
      %v381 = vpop.f32.mrb[0].mxu0
      %382 = vmatprep.mubr.f32.mxu0 0.0
      %383 = vmatmul.mubr.f32.gmra.mrb[0].mxu0 %v243
      %v384 = vpop.f32.mrb[0].mxu0
      %v385 = vadd.f32 %v197, %v384
      %v386 = vpop.f32.mrb[0].mxu0
      %387 = vmatprep.mubr.f32.mxu0 0.0
      %388 = vmatmul.mubr.f32.gmra.mrb[0].mxu0 %v246
      %v389 = vpop.f32.mrb[0].mxu0
      %v390 = vadd.f32 %v197, %v389
      %v391 = vpop.f32.mrb[0].mxu0
      %392 = vdwg.mxu0
      %393 = vst [vmem:[%s172] sm:$0xff] %v315
      %394 = vst [vmem:[%s172 + $0x8] sm:$0xff] %v320
      %395 = vst [vmem:[%s172 + $0x10] sm:$0xff] %v325
      %396 = vst [vmem:[%s172 + $0x18] sm:$0xff] %v330
      %397 = vst [vmem:[%s172 + $0x20] sm:$0xff] %v335
      %398 = vst [vmem:[%s172 + $0x28] sm:$0xff] %v340
      %399 = vst [vmem:[%s172 + $0x30] sm:$0xff] %v345
      %400 = vst [vmem:[%s172 + $0x38] sm:$0xff] %v350
      %401 = vst [vmem:[%s172 + $0x40] sm:$0xff] %v355
      %402 = vst [vmem:[%s172 + $0x48] sm:$0xff] %v360
      %403 = vst [vmem:[%s172 + $0x50] sm:$0xff] %v365
      %404 = vst [vmem:[%s172 + $0x58] sm:$0xff] %v370
      %405 = vst [vmem:[%s172 + $0x60] sm:$0xff] %v375
      %406 = vst [vmem:[%s172 + $0x68] sm:$0xff] %v380
      %407 = vst [vmem:[%s172 + $0x70] sm:$0xff] %v385
      %408 = vst [vmem:[%s172 + $0x78] sm:$0xff] %v390
      %s409 = smul.u32 16, %s14
      %p410 = scmp.lt.s32.totalorder %s409, 31
      %s411 = scalar_select %p410, %s409, 31
      %s412 = smul.addr %s411, 8
      %s413 = scalar_lea.vmem %s3, %s412
      // Predicated region
      $region33: #{first_encoder_forward.4} parent=31 // pred_check
        %p414 = pneg %p100
      $region34: #{first_encoder_forward.4} parent=31 // pred_check_branch
        %416 = sbr.rel (%p414) target = $region36
      $region35: #{first_encoder_forward.4} parent=31 // pred_region
        %s417 = smul.u32 16, %s14
      $region36: #{first_encoder_forward.4} parent=31 // pred_fallthru
        _
    $region32: #{first_encoder_forward.4} parent=5 // pred_fallthru
      _
    %p418 = scmp.le.s32.totalorder 2, %s9
    // Predicated region
    $region37: #{first_encoder_forward.4} parent=5 // pred_check
      %p419 = pneg %p418
    $region38: #{first_encoder_forward.4} parent=5 // pred_check_branch
      %421 = sbr.rel (%p419) target = $region40
    $region39: #{first_encoder_forward.4} parent=5 // pred_region
      %s422 = ssub.s32 %s9, 2
      // Predicated region
      $region41: #{first_encoder_forward.4} parent=39 // pred_check
        %p423 = pneg %p106
      $region42: #{first_encoder_forward.4} parent=39 // pred_check_branch
        %425 = sbr.rel (%p423) target = $region44
      $region43: #{first_encoder_forward.4} parent=39 // pred_region
        %s426 = smul.u32 16, %s15
        %p427 = scmp.lt.s32.totalorder %s426, 31
        %s428 = scalar_select %p427, %s426, 31
        %s429 = smul.addr %s428, 8
        %s430 = scalar_lea.vmem %s3, %s429
      $region44: #{first_encoder_forward.4} parent=39 // pred_fallthru
        _
    $region40: #{first_encoder_forward.4} parent=5 // pred_fallthru
      _
  $region6: #{first_encoder_forward.4} parent=0 // loop_footer
    %s13 = sadd.s32 1, %s9
  $region7: #{first_encoder_forward.4} parent=0 // loop_footer_branch
    %8 = sbr.rel target = $region3
  $region8: #{first_encoder_forward.4} parent=0 // loop_exit
    _

// kernel: first_encoder_forward.5
$region0: #{first_encoder_forward.5}
  #allocation0 [shape = 'u32[]', space=smem, size = 0x4, offset = 0x4, fixed_abs, tag = 'smem constant byte address 0x4 - core index']
  #allocation1 [shape = 'u32[144,128]{1,0:T(1,128)}', space=vmem, size = 0x12000, scoped, tag = 'internal scratch']
  #allocation2 [shape = 'f32[128,128]{1,0:T(8,128)}', space=vmem, size = 0x10000, scoped, tag = 'scratch operand']
  %s0 = inlined_call_operand.vmem [shape: bf16[256,256], index: 0, kind: input, shape index: {}]
  %s1 = inlined_call_operand.vmem [shape: bf16[256,128], index: 1, kind: input, shape index: {}]
  %s2 = inlined_call_operand.vmem [shape: f32[256,128], index: 2, kind: input, shape index: {}]
  %s3 = inlined_call_operand.vmem [shape: bf16[128,128], index: 3, kind: input, shape index: {}]
  %s4 = inlined_call_operand.vmem [shape: f32[1,128], index: 4, kind: input, shape index: {}]
  %s5 = inlined_call_operand.vmem [shape: f32[256,128], index: 5, kind: output, shape index: {}]
  %s6 = sld [smem:[#allocation0]]
  $region102: #{first_encoder_forward.5} parent=0
    _
  %s8 = ssub.s32 1, %s6
  %s9 = scalar_select 0, %s8, %s6
  $region1: #{first_encoder_forward.5} parent=0
    #allocation3 [shape = 'u8[65536]{0}', space=vmem, size = 0x10000, scoped, tag = 'input window, operand 0']
    loop: start=0, step=1, limit=6
    $region2: #{first_encoder_forward.5} parent=1 // loop_pre_header
      _
    $region3: #{first_encoder_forward.5} parent=1 // loop_header
      %s11 = sphi 0, %s15
      %p12 = scmp.ge.s32.totalorder %s11, 6
      %s18 = sphi 0, %s30
      %s19 = sphi 0, %s26
      %s20 = sphi 0, %s18
      %s21 = sphi 0, %s19
      %s22 = sphi 0, %s20
      %s23 = sphi 0, %s21
      %s35 = sphi 0, %s37
      %s38 = sphi 0, %s35
      %s39 = sphi 0, %s38
      %s55 = sphi 0, %s39
      %s61 = sphi 0, %s63
      %s64 = sphi 0, %s61
      %s65 = sphi 0, %s64
      %s81 = sphi 0, %s65
      %s87 = sphi 0, %s89
      %s90 = sphi 0, %s87
      %s91 = sphi 0, %s90
      %s107 = sphi 0, %s91
      %s111 = sphi 0, %s111
      %s113 = sphi 0, %s111
      %s114 = sphi 0, %s113
      %s128 = sphi 0, %s114
      %s132 = sphi 0, %s132
      %s134 = sphi 0, %s132
      %s135 = sphi 0, %s134
      %s149 = sphi 0, %s135
      %s155 = sphi 0, %s157
      %s158 = sphi 0, %s155
      %s159 = sphi 0, %s158
      %s175 = sphi 0, %s159
    $region4: #{first_encoder_forward.5} parent=1 // loop_header_branch
      %14 = sbr.rel (%p12) target = $region8
    $region5: #{first_encoder_forward.5} parent=1 // loop_body
      %s16 = ssub.s32 %s11, 1
      %s17 = ssub.s32 %s11, 2
      %s24 = sadd.s32 1, %s19
      %p25 = scmp.ge.s32.totalorder %s24, 2
      %s26 = scalar_select %p25, 0, %s24
      %s27 = sadd.s32 1, %s18
      %s28 = scalar_select %p25, %s27, %s18
      %p29 = scmp.ge.s32.totalorder %s28, 2
      %s30 = scalar_select %p29, 0, %s28
      %s31 = ssub.s32 %s18, %s30
      %s32 = ssub.s32 %s19, %s26
      %s33 = sor.u32 %s31, %s32
      %p34 = scmp.eq.s32.totalorder %s33, 0
      %s36 = sadd.s32 %s35, 1
      %s37 = scalar_select %p34, %s35, %s36
      %p40 = pneg %p34
      %p41 = scmp.eq.s32.totalorder %s11, 3
      %p42 = por %p40, %p41
      %p43 = scmp.ne.s32.totalorder %s35, %s38
      %p44 = scmp.eq.s32.totalorder %s11, 0
      %p45 = por %p43, %p44
      %p46 = scmp.ne.s32.totalorder %s35, %s38
      %p47 = scmp.eq.s32.totalorder %s16, 3
      %p48 = por %p46, %p47
      %p49 = scmp.ne.s32.totalorder %s38, %s39
      %p50 = scmp.eq.s32.totalorder %s16, 0
      %p51 = por %p49, %p50
      %p52 = scmp.ne.s32.totalorder %s38, %s39
      %p53 = scmp.eq.s32.totalorder %s17, 3
      %p54 = por %p52, %p53
      %p56 = scmp.ne.s32.totalorder %s39, %s55
      %p57 = scmp.eq.s32.totalorder %s17, 0
      %p58 = por %p56, %p57
      %s59 = ssub.s32 %s19, %s26
      %p60 = scmp.eq.s32.totalorder %s59, 0
      %s62 = sadd.s32 %s61, 1
      %s63 = scalar_select %p60, %s61, %s62
      %p66 = pneg %p60
      %p67 = scmp.eq.s32.totalorder %s11, 3
      %p68 = por %p66, %p67
      %p69 = scmp.ne.s32.totalorder %s61, %s64
      %p70 = scmp.eq.s32.totalorder %s11, 0
      %p71 = por %p69, %p70
      %p72 = scmp.ne.s32.totalorder %s61, %s64
      %p73 = scmp.eq.s32.totalorder %s16, 3
      %p74 = por %p72, %p73
      %p75 = scmp.ne.s32.totalorder %s64, %s65
      %p76 = scmp.eq.s32.totalorder %s16, 0
      %p77 = por %p75, %p76
      %p78 = scmp.ne.s32.totalorder %s64, %s65
      %p79 = scmp.eq.s32.totalorder %s17, 3
      %p80 = por %p78, %p79
      %p82 = scmp.ne.s32.totalorder %s65, %s81
      %p83 = scmp.eq.s32.totalorder %s17, 0
      %p84 = por %p82, %p83
      %s85 = ssub.s32 %s18, %s30
      %p86 = scmp.eq.s32.totalorder %s85, 0
      %s88 = sadd.s32 %s87, 1
      %s89 = scalar_select %p86, %s87, %s88
      %p92 = pneg %p86
      %p93 = scmp.eq.s32.totalorder %s11, 3
      %p94 = por %p92, %p93
      %p95 = scmp.ne.s32.totalorder %s87, %s90
      %p96 = scmp.eq.s32.totalorder %s11, 0
      %p97 = por %p95, %p96
      %p98 = scmp.ne.s32.totalorder %s87, %s90
      %p99 = scmp.eq.s32.totalorder %s16, 3
      %p100 = por %p98, %p99
      %p101 = scmp.ne.s32.totalorder %s90, %s91
      %p102 = scmp.eq.s32.totalorder %s16, 0
      %p103 = por %p101, %p102
      %p104 = scmp.ne.s32.totalorder %s90, %s91
      %p105 = scmp.eq.s32.totalorder %s17, 3
      %p106 = por %p104, %p105
      %p108 = scmp.ne.s32.totalorder %s91, %s107
      %p109 = scmp.eq.s32.totalorder %s17, 0
      %p110 = por %p108, %p109
      %s112 = sadd.s32 %s111, 1
      %p115 = scmp.eq.s32.totalorder %s11, 3
      %p116 = scmp.ne.s32.totalorder %s111, %s113
      %p117 = scmp.eq.s32.totalorder %s11, 0
      %p118 = por %p116, %p117
      %p119 = scmp.ne.s32.totalorder %s111, %s113
      %p120 = scmp.eq.s32.totalorder %s16, 3
      %p121 = por %p119, %p120
      %p122 = scmp.ne.s32.totalorder %s113, %s114
      %p123 = scmp.eq.s32.totalorder %s16, 0
      %p124 = por %p122, %p123
      %p125 = scmp.ne.s32.totalorder %s113, %s114
      %p126 = scmp.eq.s32.totalorder %s17, 3
      %p127 = por %p125, %p126
      %p129 = scmp.ne.s32.totalorder %s114, %s128
      %p130 = scmp.eq.s32.totalorder %s17, 0
      %p131 = por %p129, %p130
      %s133 = sadd.s32 %s132, 1
      %p136 = scmp.eq.s32.totalorder %s11, 3
      %p137 = scmp.ne.s32.totalorder %s132, %s134
      %p138 = scmp.eq.s32.totalorder %s11, 0
      %p139 = por %p137, %p138
      %p140 = scmp.ne.s32.totalorder %s132, %s134
      %p141 = scmp.eq.s32.totalorder %s16, 3
      %p142 = por %p140, %p141
      %p143 = scmp.ne.s32.totalorder %s134, %s135
      %p144 = scmp.eq.s32.totalorder %s16, 0
      %p145 = por %p143, %p144
      %p146 = scmp.ne.s32.totalorder %s134, %s135
      %p147 = scmp.eq.s32.totalorder %s17, 3
      %p148 = por %p146, %p147
      %p150 = scmp.ne.s32.totalorder %s135, %s149
      %p151 = scmp.eq.s32.totalorder %s17, 0
      %p152 = por %p150, %p151
      %s153 = ssub.s32 %s18, %s30
      %p154 = scmp.eq.s32.totalorder %s153, 0
      %s156 = sadd.s32 %s155, 1
      %s157 = scalar_select %p154, %s155, %s156
      %p160 = pneg %p154
      %p161 = scmp.eq.s32.totalorder %s11, 3
      %p162 = por %p160, %p161
      %p163 = scmp.ne.s32.totalorder %s155, %s158
      %p164 = scmp.eq.s32.totalorder %s11, 0
      %p165 = por %p163, %p164
      %p166 = scmp.ne.s32.totalorder %s155, %s158
      %p167 = scmp.eq.s32.totalorder %s16, 3
      %p168 = por %p166, %p167
      %p169 = scmp.ne.s32.totalorder %s158, %s159
      %p170 = scmp.eq.s32.totalorder %s16, 0
      %p171 = por %p169, %p170
      %p172 = scmp.ne.s32.totalorder %s158, %s159
      %p173 = scmp.eq.s32.totalorder %s17, 3
      %p174 = por %p172, %p173
      %p176 = scmp.ne.s32.totalorder %s159, %s175
      %p177 = scmp.eq.s32.totalorder %s17, 0
      %p178 = por %p176, %p177
      %p179 = scmp.le.s32.totalorder 1, %s11
      %p180 = scmp.lt.s32.totalorder %s11, 5
      %p181 = pnand %p179, %p180
      %p182 = pneg %p181
      // Predicated region
      $region9: #{first_encoder_forward.5} parent=5 // pred_check
        _
      $region10: #{first_encoder_forward.5} parent=5 // pred_check_branch
        %184 = sbr.rel (%p181) target = $region12
      $region11: #{first_encoder_forward.5} parent=5 // pred_region
        %s185 = ssub.s32 %s11, 1
        // Predicated region
        $region13: #{first_encoder_forward.5} parent=11 // pred_check
          %p186 = pneg %p124
        $region14: #{first_encoder_forward.5} parent=11 // pred_check_branch
          %188 = sbr.rel (%p186) target = $region16
        $region15: #{first_encoder_forward.5} parent=11 // pred_region
          _
        $region16: #{first_encoder_forward.5} parent=11 // pred_fallthru
          _
        // Predicated region
        $region17: #{first_encoder_forward.5} parent=11 // pred_check
          %p189 = pneg %p145
        $region18: #{first_encoder_forward.5} parent=11 // pred_check_branch
          %191 = sbr.rel (%p189) target = $region20
        $region19: #{first_encoder_forward.5} parent=11 // pred_region
          _
        $region20: #{first_encoder_forward.5} parent=11 // pred_fallthru
          _
      $region12: #{first_encoder_forward.5} parent=5 // pred_fallthru
        _
      %p192 = scmp.lt.s32.totalorder %s11, 4
      // Predicated region
      $region21: #{first_encoder_forward.5} parent=5 // pred_check
        %p193 = pneg %p192
      $region22: #{first_encoder_forward.5} parent=5 // pred_check_branch
        %195 = sbr.rel (%p193) target = $region24
      $region23: #{first_encoder_forward.5} parent=5 // pred_region
        // Predicated region
        $region25: #{first_encoder_forward.5} parent=23 // pred_check
          %p196 = pneg %p45
        $region26: #{first_encoder_forward.5} parent=23 // pred_check_branch
          %198 = sbr.rel (%p196) target = $region28
        $region27: #{first_encoder_forward.5} parent=23 // pred_region
          %s199 = sand.u32 %s35, 1
          %s200 = sand.u32 %s35, 1
          %s201 = smul.addr %s200, 64
          %s202 = scalar_lea.vmem [#allocation3], %s201
          %s203 = smul.u32 16, %s18
          %s204 = smul.addr %s203, 2
          %s205 = sadd.s32 %s19, %s204
          %s206 = smul.addr %s205, 4
          %s207 = scalar_lea.vmem %s0, %s206
          // Predicated region
          $region29: #{first_encoder_forward.5} parent=27 // pred_check
            _
          $region30: #{first_encoder_forward.5} parent=27 // pred_check_branch
            %209 = sbr.rel (0) target = $region32
          $region31: #{first_encoder_forward.5} parent=27 // pred_region
            // Predicated region
            $region33: #{first_encoder_forward.5} parent=31 // pred_check
              _
            $region34: #{first_encoder_forward.5} parent=31 // pred_check_branch
              %211 = sbr.rel target = $region36
            $region35: #{first_encoder_forward.5} parent=31 // pred_region
              // Predicated region
              $region48: #{first_encoder_forward.5} parent=35 // pred_check
                _
              $region49: #{first_encoder_forward.5} parent=35 // pred_check_branch
                %256 = sbr.rel (0) target = $region51
              $region50: #{first_encoder_forward.5} parent=35 // pred_region
                loop: start=0, step=1, limit=1
                $region52: #{first_encoder_forward.5} parent=50 // loop_pre_header
                  _
                $region53: #{first_encoder_forward.5} parent=50 // loop_header
                  %s258 = sphi 0, %s262
                  %p259 = scmp.ge.s32.totalorder %s258, 1
                  %s263 = sphi %s207, %s207
                  %s264 = sphi %s202, %s202
                $region54: #{first_encoder_forward.5} parent=50 // loop_header_branch
                  %261 = sbr.rel (%p259) target = $region58
                $region55: #{first_encoder_forward.5} parent=50 // loop_body
                  _
                $region56: #{first_encoder_forward.5} parent=50 // loop_footer
                  %s262 = sadd.s32 1, %s258
                $region57: #{first_encoder_forward.5} parent=50 // loop_footer_branch
                  %257 = sbr.rel target = $region53
                $region58: #{first_encoder_forward.5} parent=50 // loop_exit
                  _
                loop: start=0, step=1, limit=1
                $region59: #{first_encoder_forward.5} parent=50 // loop_pre_header
                  _
                $region60: #{first_encoder_forward.5} parent=50 // loop_header
                  %s267 = sphi 0, %s271
                  %p268 = scmp.ge.s32.totalorder %s267, 1
                  %s272 = sphi %s207, %s207
                  %s273 = sphi %s202, %s202
                $region61: #{first_encoder_forward.5} parent=50 // loop_header_branch
                  %270 = sbr.rel (%p268) target = $region65
                $region62: #{first_encoder_forward.5} parent=50 // loop_body
                  %v274 = vld [vmem:[%s272] sm:$0xf]
                  %275 = vst [vmem:[%s273] sm:$0xf] %v274
                  %v276 = vld [vmem:[%s272 + $0x8] sm:$0xf]
                  %277 = vst [vmem:[%s273 + $0x4] sm:$0xf] %v276
                  %v278 = vld [vmem:[%s272 + $0x10] sm:$0xf]
                  %279 = vst [vmem:[%s273 + $0x8] sm:$0xf] %v278
                  %v280 = vld [vmem:[%s272 + $0x18] sm:$0xf]
                  %281 = vst [vmem:[%s273 + $0xc] sm:$0xf] %v280
                  %v282 = vld [vmem:[%s272 + $0x20] sm:$0xf]
                  %283 = vst [vmem:[%s273 + $0x10] sm:$0xf] %v282
                  %v284 = vld [vmem:[%s272 + $0x28] sm:$0xf]
                  %285 = vst [vmem:[%s273 + $0x14] sm:$0xf] %v284
                  %v286 = vld [vmem:[%s272 + $0x30] sm:$0xf]
                  %287 = vst [vmem:[%s273 + $0x18] sm:$0xf] %v286
                  %v288 = vld [vmem:[%s272 + $0x38] sm:$0xf]
                  %289 = vst [vmem:[%s273 + $0x1c] sm:$0xf] %v288
                  %v290 = vld [vmem:[%s272 + $0x40] sm:$0xf]
                  %291 = vst [vmem:[%s273 + $0x20] sm:$0xf] %v290
                  %v292 = vld [vmem:[%s272 + $0x48] sm:$0xf]
                  %293 = vst [vmem:[%s273 + $0x24] sm:$0xf] %v292
                  %v294 = vld [vmem:[%s272 + $0x50] sm:$0xf]
                  %295 = vst [vmem:[%s273 + $0x28] sm:$0xf] %v294
                  %v296 = vld [vmem:[%s272 + $0x58] sm:$0xf]
                  %297 = vst [vmem:[%s273 + $0x2c] sm:$0xf] %v296
                  %v298 = vld [vmem:[%s272 + $0x60] sm:$0xf]
                  %299 = vst [vmem:[%s273 + $0x30] sm:$0xf] %v298
                  %v300 = vld [vmem:[%s272 + $0x68] sm:$0xf]
                  %301 = vst [vmem:[%s273 + $0x34] sm:$0xf] %v300
                  %v302 = vld [vmem:[%s272 + $0x70] sm:$0xf]
                  %303 = vst [vmem:[%s273 + $0x38] sm:$0xf] %v302
                  %v304 = vld [vmem:[%s272 + $0x78] sm:$0xf]
                  %305 = vst [vmem:[%s273 + $0x3c] sm:$0xf] %v304
                $region63: #{first_encoder_forward.5} parent=50 // loop_footer
                  %s271 = sadd.s32 1, %s267
                $region64: #{first_encoder_forward.5} parent=50 // loop_footer_branch
                  %266 = sbr.rel target = $region60
                $region65: #{first_encoder_forward.5} parent=50 // loop_exit
                  _
              $region51: #{first_encoder_forward.5} parent=35 // pred_fallthru
                _
            $region36: #{first_encoder_forward.5} parent=31 // pred_fallthru
              _
            // Predicated region
            $region37: #{first_encoder_forward.5} parent=31 // pred_check
              _
            $region38: #{first_encoder_forward.5} parent=31 // pred_check_branch
              %213 = sbr.rel (0) target = $region40
            $region39: #{first_encoder_forward.5} parent=31 // pred_region
              loop: start=0, step=1, limit=1
              $region41: #{first_encoder_forward.5} parent=39 // loop_pre_header
                _
              $region42: #{first_encoder_forward.5} parent=39 // loop_header
                %s216 = sphi 0, %s220
                %p217 = scmp.ge.s32.totalorder %s216, 1
                %s221 = sphi %s207, %s207
                %s222 = sphi %s202, %s202
              $region43: #{first_encoder_forward.5} parent=39 // loop_header_branch
                %219 = sbr.rel (%p217) target = $region47
              $region44: #{first_encoder_forward.5} parent=39 // loop_body
                %v223 = vld [vmem:[%s221] sm:$0xf]
                %224 = vst [vmem:[%s222] sm:$0xf] %v223
                %v225 = vld [vmem:[%s221 + $0x8] sm:$0xf]
                %226 = vst [vmem:[%s222 + $0x4] sm:$0xf] %v225
                %v227 = vld [vmem:[%s221 + $0x10] sm:$0xf]
                %228 = vst [vmem:[%s222 + $0x8] sm:$0xf] %v227
                %v229 = vld [vmem:[%s221 + $0x18] sm:$0xf]
                %230 = vst [vmem:[%s222 + $0xc] sm:$0xf] %v229
                %v231 = vld [vmem:[%s221 + $0x20] sm:$0xf]
                %232 = vst [vmem:[%s222 + $0x10] sm:$0xf] %v231
                %v233 = vld [vmem:[%s221 + $0x28] sm:$0xf]
                %234 = vst [vmem:[%s222 + $0x14] sm:$0xf] %v233
                %v235 = vld [vmem:[%s221 + $0x30] sm:$0xf]
                %236 = vst [vmem:[%s222 + $0x18] sm:$0xf] %v235
                %v237 = vld [vmem:[%s221 + $0x38] sm:$0xf]
                %238 = vst [vmem:[%s222 + $0x1c] sm:$0xf] %v237
                %v239 = vld [vmem:[%s221 + $0x40] sm:$0xf]
                %240 = vst [vmem:[%s222 + $0x20] sm:$0xf] %v239
                %v241 = vld [vmem:[%s221 + $0x48] sm:$0xf]
                %242 = vst [vmem:[%s222 + $0x24] sm:$0xf] %v241
                %v243 = vld [vmem:[%s221 + $0x50] sm:$0xf]
                %244 = vst [vmem:[%s222 + $0x28] sm:$0xf] %v243
                %v245 = vld [vmem:[%s221 + $0x58] sm:$0xf]
                %246 = vst [vmem:[%s222 + $0x2c] sm:$0xf] %v245
                %v247 = vld [vmem:[%s221 + $0x60] sm:$0xf]
                %248 = vst [vmem:[%s222 + $0x30] sm:$0xf] %v247
                %v249 = vld [vmem:[%s221 + $0x68] sm:$0xf]
                %250 = vst [vmem:[%s222 + $0x34] sm:$0xf] %v249
                %v251 = vld [vmem:[%s221 + $0x70] sm:$0xf]
                %252 = vst [vmem:[%s222 + $0x38] sm:$0xf] %v251
                %v253 = vld [vmem:[%s221 + $0x78] sm:$0xf]
                %254 = vst [vmem:[%s222 + $0x3c] sm:$0xf] %v253
              $region45: #{first_encoder_forward.5} parent=39 // loop_footer
                %s220 = sadd.s32 1, %s216
              $region46: #{first_encoder_forward.5} parent=39 // loop_footer_branch
                %215 = sbr.rel target = $region42
              $region47: #{first_encoder_forward.5} parent=39 // loop_exit
                _
            $region40: #{first_encoder_forward.5} parent=31 // pred_fallthru
              _
          $region32: #{first_encoder_forward.5} parent=27 // pred_fallthru
            _
          %306 = vnop
        $region28: #{first_encoder_forward.5} parent=23 // pred_fallthru
          _
        // Predicated region
        $region66: #{first_encoder_forward.5} parent=23 // pred_check
          %p307 = pneg %p71
        $region67: #{first_encoder_forward.5} parent=23 // pred_check_branch
          %309 = sbr.rel (%p307) target = $region69
        $region68: #{first_encoder_forward.5} parent=23 // pred_region
          %s310 = smul.u32 16, %s19
          %p311 = scmp.lt.s32.totalorder %s310, 31
          %s312 = scalar_select %p311, %s310, 31
          %s313 = smul.addr %s312, 4
          %s314 = scalar_lea.vmem %s1, %s313
          %s315 = smul.u32 16, %s19
        $region69: #{first_encoder_forward.5} parent=23 // pred_fallthru
          _
        // Predicated region
        $region70: #{first_encoder_forward.5} parent=23 // pred_check
          %p316 = pneg %p97
        $region71: #{first_encoder_forward.5} parent=23 // pred_check_branch
          %318 = sbr.rel (%p316) target = $region73
        $region72: #{first_encoder_forward.5} parent=23 // pred_region
          %s319 = smul.u32 16, %s18
          %p320 = scmp.lt.s32.totalorder %s319, 31
          %s321 = scalar_select %p320, %s319, 31
          %s322 = smul.addr %s321, 8
          %s323 = scalar_lea.vmem %s2, %s322
          %s324 = smul.u32 16, %s18
        $region73: #{first_encoder_forward.5} parent=23 // pred_fallthru
          _
      $region24: #{first_encoder_forward.5} parent=5 // pred_fallthru
        _
      %p325 = scmp.le.s32.totalorder 1, %s11
      %p326 = scmp.lt.s32.totalorder %s11, 5
      %p327 = pnand %p325, %p326
      %p328 = pneg %p327
      // Predicated region
      $region74: #{first_encoder_forward.5} parent=5 // pred_check
        _
      $region75: #{first_encoder_forward.5} parent=5 // pred_check_branch
        %330 = sbr.rel (%p327) target = $region77
      $region76: #{first_encoder_forward.5} parent=5 // pred_region
        %s331 = ssub.s32 %s11, 1
        %s332 = sand.u32 %s38, 1
        %s333 = sand.u32 %s38, 1
        %s334 = smul.addr %s333, 64
        %s335 = scalar_lea.vmem [#allocation3], %s334
        // Predicated region
        $region78: #{first_encoder_forward.5} parent=76 // pred_check
          %p336 = pneg %p51
        $region79: #{first_encoder_forward.5} parent=76 // pred_check_branch
          %338 = sbr.rel (%p336) target = $region81
        $region80: #{first_encoder_forward.5} parent=76 // pred_region
          _
        $region81: #{first_encoder_forward.5} parent=76 // pred_fallthru
          _
        %s339 = sand.u32 %s38, 1
        %s340 = sand.u32 %s38, 1
        %s341 = smul.addr %s340, 64
        %s342 = scalar_lea.vmem [#allocation3], %s341
        %p343 = pneg %p51
        %p344 = pneg %p48
        %s345 = smul.u32 16, %s21
        %p346 = scmp.lt.s32.totalorder %s345, 31
        %s347 = scalar_select %p346, %s345, 31
        %s348 = smul.addr %s347, 4
        %s349 = scalar_lea.vmem %s1, %s348
        %p350 = pneg %p77
        %p351 = pneg %p74
        %s352 = smul.u32 16, %s20
        %p353 = scmp.lt.s32.totalorder %s352, 31
        %s354 = scalar_select %p353, %s352, 31
        %s355 = smul.addr %s354, 8
        %s356 = scalar_lea.vmem %s2, %s355
        %p357 = pneg %p103
        %p358 = pneg %p100
        %p359 = pneg %p124
        %p360 = pneg %p121
        %p361 = pneg %p145
        %p362 = pneg %p142
        %p363 = pneg %p171
        %p364 = pneg %p168
        %s365 = smul.u32 16, %s20
        %p366 = scmp.lt.s32.totalorder %s365, 31
        %s367 = scalar_select %p366, %s365, 31
        %s368 = smul.addr %s367, 8
        %s369 = scalar_lea.vmem %s5, %s368
        %s370 = smul.u32 16, %s20
        %s371 = smul.u32 16, %s21
        %p372 = scmp.lt.s32.totalorder %s371, 31
        %s373 = scalar_select %p372, %s371, 31
        %s374 = smul.addr %s373, 4
        %s375 = scalar_lea.vmem %s1, %s374
        %s376 = smul.u32 16, %s21
        %s377 = smul.u32 16, %s20
        %p378 = scmp.lt.s32.totalorder %s377, 31
        %s379 = scalar_select %p378, %s377, 31
        %s380 = smul.addr %s379, 8
        %s381 = scalar_lea.vmem %s2, %s380
        %s382 = smul.u32 16, %s20
        %s383 = smul.u32 16, %s20
        %p384 = scmp.lt.s32.totalorder %s383, 31
        %s385 = scalar_select %p384, %s383, 31
        %s386 = smul.addr %s385, 8
        %s387 = scalar_lea.vmem %s5, %s386
        %s388 = smul.u32 16, %s20
        %p390 = scmp.eq.s32.totalorder %s21, 0
        // Predicated region
        $region82: #{first_encoder_forward.5} parent=76 // pred_check
          %p391 = pneg %p390
        $region83: #{first_encoder_forward.5} parent=76 // pred_check_branch
          %393 = sbr.rel (%p391) target = $region85
        $region84: #{first_encoder_forward.5} parent=76 // pred_region
          %394 = vst [vmem:[#allocation2] sm:$0xff] 0.0
          %395 = vst [vmem:[#allocation2 + $0x8] sm:$0xff] 0.0
          %396 = vst [vmem:[#allocation2 + $0x10] sm:$0xff] 0.0
          %397 = vst [vmem:[#allocation2 + $0x18] sm:$0xff] 0.0
          %398 = vst [vmem:[#allocation2 + $0x20] sm:$0xff] 0.0
          %399 = vst [vmem:[#allocation2 + $0x28] sm:$0xff] 0.0
          %400 = vst [vmem:[#allocation2 + $0x30] sm:$0xff] 0.0
          %401 = vst [vmem:[#allocation2 + $0x38] sm:$0xff] 0.0
          %402 = vst [vmem:[#allocation2 + $0x40] sm:$0xff] 0.0
          %403 = vst [vmem:[#allocation2 + $0x48] sm:$0xff] 0.0
          %404 = vst [vmem:[#allocation2 + $0x50] sm:$0xff] 0.0
          %405 = vst [vmem:[#allocation2 + $0x58] sm:$0xff] 0.0
          %406 = vst [vmem:[#allocation2 + $0x60] sm:$0xff] 0.0
          %407 = vst [vmem:[#allocation2 + $0x68] sm:$0xff] 0.0
          %408 = vst [vmem:[#allocation2 + $0x70] sm:$0xff] 0.0
          %409 = vst [vmem:[#allocation2 + $0x78] sm:$0xff] 0.0
        $region85: #{first_encoder_forward.5} parent=76 // pred_fallthru
          _
        %v410 = vld [vmem:[#allocation2] sm:$0xff]
        %v411 = vld [vmem:[#allocation2 + $0x8] sm:$0xff]
        %v412 = vld [vmem:[#allocation2 + $0x10] sm:$0xff]
        %v413 = vld [vmem:[#allocation2 + $0x18] sm:$0xff]
        %v414 = vld [vmem:[#allocation2 + $0x20] sm:$0xff]
        %v415 = vld [vmem:[#allocation2 + $0x28] sm:$0xff]
        %v416 = vld [vmem:[#allocation2 + $0x30] sm:$0xff]
        %v417 = vld [vmem:[#allocation2 + $0x38] sm:$0xff]
        %v418 = vld [vmem:[#allocation2 + $0x40] sm:$0xff]
        %v419 = vld [vmem:[#allocation2 + $0x48] sm:$0xff]
        %v420 = vld [vmem:[#allocation2 + $0x50] sm:$0xff]
        %v421 = vld [vmem:[#allocation2 + $0x58] sm:$0xff]
        %v422 = vld [vmem:[#allocation2 + $0x60] sm:$0xff]
        %v423 = vld [vmem:[#allocation2 + $0x68] sm:$0xff]
        %v424 = vld [vmem:[#allocation2 + $0x70] sm:$0xff]
        %v425 = vld [vmem:[#allocation2 + $0x78] sm:$0xff]
        %v426 = vld [vmem:[%s335] sm:$0xf]
        %v427 = vld [vmem:[%s335 + $0x4] sm:$0xf]
        %v428 = vld [vmem:[%s335 + $0x8] sm:$0xf]
        %v429 = vld [vmem:[%s335 + $0xc] sm:$0xf]
        %v430 = vld [vmem:[%s335 + $0x10] sm:$0xf]
        %v431 = vld [vmem:[%s335 + $0x14] sm:$0xf]
        %v432 = vld [vmem:[%s335 + $0x18] sm:$0xf]
        %v433 = vld [vmem:[%s335 + $0x1c] sm:$0xf]
        %v434 = vld [vmem:[%s335 + $0x20] sm:$0xf]
        %v435 = vld [vmem:[%s335 + $0x24] sm:$0xf]
        %v436 = vld [vmem:[%s335 + $0x28] sm:$0xf]
        %v437 = vld [vmem:[%s335 + $0x2c] sm:$0xf]
        %v438 = vld [vmem:[%s335 + $0x30] sm:$0xf]
        %v439 = vld [vmem:[%s335 + $0x34] sm:$0xf]
        %v440 = vld [vmem:[%s335 + $0x38] sm:$0xf]
        %v441 = vld [vmem:[%s335 + $0x3c] sm:$0xf]
        %v442 = vld [vmem:[%s375] sm:$0xf]
        %v443 = vld [vmem:[%s375 + $0x4] sm:$0xf]
        %v444 = vld [vmem:[%s375 + $0x8] sm:$0xf]
        %v445 = vld [vmem:[%s375 + $0xc] sm:$0xf]
        %v446 = vld [vmem:[%s375 + $0x10] sm:$0xf]
        %v447 = vld [vmem:[%s375 + $0x14] sm:$0xf]
        %v448 = vld [vmem:[%s375 + $0x18] sm:$0xf]
        %v449 = vld [vmem:[%s375 + $0x1c] sm:$0xf]
        %v450 = vld [vmem:[%s375 + $0x20] sm:$0xf]
        %v451 = vld [vmem:[%s375 + $0x24] sm:$0xf]
        %v452 = vld [vmem:[%s375 + $0x28] sm:$0xf]
        %v453 = vld [vmem:[%s375 + $0x2c] sm:$0xf]
        %v454 = vld [vmem:[%s375 + $0x30] sm:$0xf]
        %v455 = vld [vmem:[%s375 + $0x34] sm:$0xf]
        %v456 = vld [vmem:[%s375 + $0x38] sm:$0xf]
        %v457 = vld [vmem:[%s375 + $0x3c] sm:$0xf]
        %v474 = vunpack.c.l.b16 %v426
        %v475 = vunpack.c.l.b16 %v427
        %v476 = vunpack.c.l.b16 %v428
        %v477 = vunpack.c.l.b16 %v429
        %v478 = vunpack.c.l.b16 %v430
        %v479 = vunpack.c.l.b16 %v431
        %v480 = vunpack.c.l.b16 %v432
        %v481 = vunpack.c.l.b16 %v433
        %v482 = vunpack.c.l.b16 %v434
        %v483 = vunpack.c.l.b16 %v435
        %v484 = vunpack.c.l.b16 %v436
        %v485 = vunpack.c.l.b16 %v437
        %v486 = vunpack.c.l.b16 %v438
        %v487 = vunpack.c.l.b16 %v439
        %v488 = vunpack.c.l.b16 %v440
        %v489 = vunpack.c.l.b16 %v441
        %v490 = vpack.c.b16 %v475, %v474
        %v491 = vpack.c.b16 %v477, %v476
        %v492 = vpack.c.b16 %v479, %v478
        %v493 = vpack.c.b16 %v481, %v480
        %v494 = vpack.c.b16 %v483, %v482
        %v495 = vpack.c.b16 %v485, %v484
        %v496 = vpack.c.b16 %v487, %v486
        %v497 = vpack.c.b16 %v489, %v488
        %v522 = vunpack.c.l.b16 %v442
        %v523 = vunpack.c.l.b16 %v443
        %v524 = vunpack.c.l.b16 %v444
        %v525 = vunpack.c.l.b16 %v445
        %v526 = vunpack.c.l.b16 %v446
        %v527 = vunpack.c.l.b16 %v447
        %v528 = vunpack.c.l.b16 %v448
        %v529 = vunpack.c.l.b16 %v449
        %v530 = vunpack.c.l.b16 %v450
        %v531 = vunpack.c.l.b16 %v451
        %v532 = vunpack.c.l.b16 %v452
        %v533 = vunpack.c.l.b16 %v453
        %v534 = vunpack.c.l.b16 %v454
        %v535 = vunpack.c.l.b16 %v455
        %v536 = vunpack.c.l.b16 %v456
        %v537 = vunpack.c.l.b16 %v457
        %v538 = vpack.c.b16 %v523, %v522
        %v539 = vpack.c.b16 %v525, %v524
        %v540 = vpack.c.b16 %v527, %v526
        %v541 = vpack.c.b16 %v529, %v528
        %v542 = vpack.c.b16 %v531, %v530
        %v543 = vpack.c.b16 %v533, %v532
        %v544 = vpack.c.b16 %v535, %v534
        %v545 = vpack.c.b16 %v537, %v536
        %554 = vmatprep.subr.bf16.mxu0 0
        %555 = vmatpush1.bf16.msra.mxu0 %v538
        %556 = vmatprep.subr.bf16.mxu0 0
        %557 = vmatpush1.bf16.msra.mxu0 %v539
        %558 = vmatprep.subr.bf16.mxu0 0
        %559 = vmatpush1.bf16.msra.mxu0 %v540
        %560 = vmatprep.subr.bf16.mxu0 0
        %561 = vmatpush1.bf16.msra.mxu0 %v541
        %562 = vmatprep.subr.bf16.mxu0 0
        %563 = vmatpush1.bf16.msra.mxu0 %v542
        %564 = vmatprep.subr.bf16.mxu0 0
        %565 = vmatpush1.bf16.msra.mxu0 %v543
        %566 = vmatprep.subr.bf16.mxu0 0
        %567 = vmatpush1.bf16.msra.mxu0 %v544
        %568 = vmatprep.subr.bf16.mxu0 0
        %569 = vmatpush1.bf16.msra.mxu0 %v545
        %570 = vmatprep.subr.bf16.mxu0 0
        %571 = vmatpush1.bf16.msra.mxu0 0
        %572 = vmatprep.subr.bf16.mxu0 0
        %573 = vmatpush1.bf16.msra.mxu0 0
        %574 = vmatprep.subr.bf16.mxu0 0
        %575 = vmatpush1.bf16.msra.mxu0 0
        %576 = vmatprep.subr.bf16.mxu0 0
        %577 = vmatpush1.bf16.msra.mxu0 0
        %578 = vmatprep.subr.bf16.mxu0 0
        %579 = vmatpush1.bf16.msra.mxu0 0
        %580 = vmatprep.subr.bf16.mxu0 0
        %581 = vmatpush1.bf16.msra.mxu0 0
        %582 = vmatprep.subr.bf16.mxu0 0
        %583 = vmatpush1.bf16.msra.mxu0 0
        %584 = vmatprep.subr.bf16.mxu0 0
        %585 = vmatpush1.bf16.msra.mxu0 0
        %586 = vmatprep.mubr.bf16.mxu0 0
        %587 = vmatmul.mubr.bf16.gmra.mrb[0].mxu0 %v490
        %v588 = vpop.f32.mrb[0].mxu0
        %v589 = vadd.f32 0.0, %v588
        %v590 = vpop.f32.mrb[0].mxu0
        %v591 = vpop.f32.mrb[0].mxu0
        %v592 = vadd.f32 0.0, %v591
        %v593 = vpop.f32.mrb[0].mxu0
        %594 = vmatprep.mubr.bf16.mxu0 0
        %595 = vmatmul.mubr.bf16.gmra.mrb[0].mxu0 %v491
        %v596 = vpop.f32.mrb[0].mxu0
        %v597 = vadd.f32 0.0, %v596
        %v598 = vpop.f32.mrb[0].mxu0
        %v599 = vpop.f32.mrb[0].mxu0
        %v600 = vadd.f32 0.0, %v599
        %v601 = vpop.f32.mrb[0].mxu0
        %602 = vmatprep.mubr.bf16.mxu0 0
        %603 = vmatmul.mubr.bf16.gmra.mrb[0].mxu0 %v492
        %v604 = vpop.f32.mrb[0].mxu0
        %v605 = vadd.f32 0.0, %v604
        %v606 = vpop.f32.mrb[0].mxu0
        %v607 = vpop.f32.mrb[0].mxu0
        %v608 = vadd.f32 0.0, %v607
        %v609 = vpop.f32.mrb[0].mxu0
        %610 = vmatprep.mubr.bf16.mxu0 0
        %611 = vmatmul.mubr.bf16.gmra.mrb[0].mxu0 %v493
        %v612 = vpop.f32.mrb[0].mxu0
        %v613 = vadd.f32 0.0, %v612
        %v614 = vpop.f32.mrb[0].mxu0
        %v615 = vpop.f32.mrb[0].mxu0
        %v616 = vadd.f32 0.0, %v615
        %v617 = vpop.f32.mrb[0].mxu0
        %618 = vmatprep.mubr.bf16.mxu0 0
        %619 = vmatmul.mubr.bf16.gmra.mrb[0].mxu0 %v494
        %v620 = vpop.f32.mrb[0].mxu0
        %v621 = vadd.f32 0.0, %v620
        %v622 = vpop.f32.mrb[0].mxu0
        %v623 = vpop.f32.mrb[0].mxu0
        %v624 = vadd.f32 0.0, %v623
        %v625 = vpop.f32.mrb[0].mxu0
        %626 = vmatprep.mubr.bf16.mxu0 0
        %627 = vmatmul.mubr.bf16.gmra.mrb[0].mxu0 %v495
        %v628 = vpop.f32.mrb[0].mxu0
        %v629 = vadd.f32 0.0, %v628
        %v630 = vpop.f32.mrb[0].mxu0
        %v631 = vpop.f32.mrb[0].mxu0
        %v632 = vadd.f32 0.0, %v631
        %v633 = vpop.f32.mrb[0].mxu0
        %634 = vmatprep.mubr.bf16.mxu0 0
        %635 = vmatmul.mubr.bf16.gmra.mrb[0].mxu0 %v496
        %v636 = vpop.f32.mrb[0].mxu0
        %v637 = vadd.f32 0.0, %v636
        %v638 = vpop.f32.mrb[0].mxu0
        %v639 = vpop.f32.mrb[0].mxu0
        %v640 = vadd.f32 0.0, %v639
        %v641 = vpop.f32.mrb[0].mxu0
        %642 = vmatprep.mubr.bf16.mxu0 0
        %643 = vmatmul.mubr.bf16.gmra.mrb[0].mxu0 %v497
        %v644 = vpop.f32.mrb[0].mxu0
        %v645 = vadd.f32 0.0, %v644
        %v646 = vpop.f32.mrb[0].mxu0
        %v647 = vpop.f32.mrb[0].mxu0
        %v648 = vadd.f32 0.0, %v647
        %v649 = vpop.f32.mrb[0].mxu0
        %650 = vdwg.mxu0
        %v651 = vadd.f32 %v410, %v589
        %v652 = vadd.f32 %v411, %v592
        %v653 = vadd.f32 %v412, %v597
        %v654 = vadd.f32 %v413, %v600
        %v655 = vadd.f32 %v414, %v605
        %v656 = vadd.f32 %v415, %v608
        %v657 = vadd.f32 %v416, %v613
        %v658 = vadd.f32 %v417, %v616
        %v659 = vadd.f32 %v418, %v621
        %v660 = vadd.f32 %v419, %v624
        %v661 = vadd.f32 %v420, %v629
        %v662 = vadd.f32 %v421, %v632
        %v663 = vadd.f32 %v422, %v637
        %v664 = vadd.f32 %v423, %v640
        %v665 = vadd.f32 %v424, %v645
        %v666 = vadd.f32 %v425, %v648
        %667 = vst [vmem:[#allocation2] sm:$0xff] %v651
        %668 = vst [vmem:[#allocation2 + $0x8] sm:$0xff] %v652
        %669 = vst [vmem:[#allocation2 + $0x10] sm:$0xff] %v653
        %670 = vst [vmem:[#allocation2 + $0x18] sm:$0xff] %v654
        %671 = vst [vmem:[#allocation2 + $0x20] sm:$0xff] %v655
        %672 = vst [vmem:[#allocation2 + $0x28] sm:$0xff] %v656
        %673 = vst [vmem:[#allocation2 + $0x30] sm:$0xff] %v657
        %674 = vst [vmem:[#allocation2 + $0x38] sm:$0xff] %v658
        %675 = vst [vmem:[#allocation2 + $0x40] sm:$0xff] %v659
        %676 = vst [vmem:[#allocation2 + $0x48] sm:$0xff] %v660
        %677 = vst [vmem:[#allocation2 + $0x50] sm:$0xff] %v661
        %678 = vst [vmem:[#allocation2 + $0x58] sm:$0xff] %v662
        %679 = vst [vmem:[#allocation2 + $0x60] sm:$0xff] %v663
        %680 = vst [vmem:[#allocation2 + $0x68] sm:$0xff] %v664
        %681 = vst [vmem:[#allocation2 + $0x70] sm:$0xff] %v665
        %682 = vst [vmem:[#allocation2 + $0x78] sm:$0xff] %v666
        %p683 = scmp.eq.s32.totalorder %s21, 1
        // Predicated region
        $region86: #{first_encoder_forward.5} parent=76 // pred_check
          %p684 = pneg %p683
        $region87: #{first_encoder_forward.5} parent=76 // pred_check_branch
          %686 = sbr.rel (%p684) target = $region89
        $region88: #{first_encoder_forward.5} parent=76 // pred_region
          %v687 = vld [vmem:[#allocation2] sm:$0xff]
          %v688 = vld [vmem:[#allocation2 + $0x8] sm:$0xff]
          %v689 = vld [vmem:[#allocation2 + $0x10] sm:$0xff]
          %v690 = vld [vmem:[#allocation2 + $0x18] sm:$0xff]
          %v691 = vld [vmem:[#allocation2 + $0x20] sm:$0xff]
          %v692 = vld [vmem:[#allocation2 + $0x28] sm:$0xff]
          %v693 = vld [vmem:[#allocation2 + $0x30] sm:$0xff]
          %v694 = vld [vmem:[#allocation2 + $0x38] sm:$0xff]
          %v695 = vld [vmem:[#allocation2 + $0x40] sm:$0xff]
          %v696 = vld [vmem:[#allocation2 + $0x48] sm:$0xff]
          %v697 = vld [vmem:[#allocation2 + $0x50] sm:$0xff]
          %v698 = vld [vmem:[#allocation2 + $0x58] sm:$0xff]
          %v699 = vld [vmem:[#allocation2 + $0x60] sm:$0xff]
          %v700 = vld [vmem:[#allocation2 + $0x68] sm:$0xff]
          %v701 = vld [vmem:[#allocation2 + $0x70] sm:$0xff]
          %v702 = vld [vmem:[#allocation2 + $0x78] sm:$0xff]
          %v703 = vpack.c.bf16 %v688, %v687
          %v704 = vpack.c.bf16 %v690, %v689
          %v705 = vpack.c.bf16 %v692, %v691
          %v706 = vpack.c.bf16 %v694, %v693
          %v707 = vpack.c.bf16 %v696, %v695
          %v708 = vpack.c.bf16 %v698, %v697
          %v709 = vpack.c.bf16 %v700, %v699
          %v710 = vpack.c.bf16 %v702, %v701
          %v711 = vld [vmem:[%s3] sm:$0xf]
          %v712 = vld [vmem:[%s3 + $0x4] sm:$0xf]
          %v713 = vld [vmem:[%s3 + $0x8] sm:$0xf]
          %v714 = vld [vmem:[%s3 + $0xc] sm:$0xf]
          %v715 = vld [vmem:[%s3 + $0x10] sm:$0xf]
          %v716 = vld [vmem:[%s3 + $0x14] sm:$0xf]
          %v717 = vld [vmem:[%s3 + $0x18] sm:$0xf]
          %v718 = vld [vmem:[%s3 + $0x1c] sm:$0xf]
          %v719 = vld [vmem:[%s3 + $0x20] sm:$0xf]
          %v720 = vld [vmem:[%s3 + $0x24] sm:$0xf]
          %v721 = vld [vmem:[%s3 + $0x28] sm:$0xf]
          %v722 = vld [vmem:[%s3 + $0x2c] sm:$0xf]
          %v723 = vld [vmem:[%s3 + $0x30] sm:$0xf]
          %v724 = vld [vmem:[%s3 + $0x34] sm:$0xf]
          %v725 = vld [vmem:[%s3 + $0x38] sm:$0xf]
          %v726 = vld [vmem:[%s3 + $0x3c] sm:$0xf]
          %v727 = vld [vmem:[%s4] sm:$0x1]
          %v729 = vlaneseq
          %v730 = vshrl.u32 %v729, 7
          %v731 = vsub.s32 0, %v730
          %v732 = vrot.slane %v727, %v731
          %v750 = vunpack.c.l.b16 %v711
          %v751 = vunpack.c.l.b16 %v712
          %v752 = vunpack.c.l.b16 %v713
          %v753 = vunpack.c.l.b16 %v714
          %v754 = vunpack.c.l.b16 %v715
          %v755 = vunpack.c.l.b16 %v716
          %v756 = vunpack.c.l.b16 %v717
          %v757 = vunpack.c.l.b16 %v718
          %v758 = vunpack.c.l.b16 %v719
          %v759 = vunpack.c.l.b16 %v720
          %v760 = vunpack.c.l.b16 %v721
          %v761 = vunpack.c.l.b16 %v722
          %v762 = vunpack.c.l.b16 %v723
          %v763 = vunpack.c.l.b16 %v724
          %v764 = vunpack.c.l.b16 %v725
          %v765 = vunpack.c.l.b16 %v726
          %v766 = vpack.c.b16 %v751, %v750
          %v767 = vpack.c.b16 %v753, %v752
          %v768 = vpack.c.b16 %v755, %v754
          %v769 = vpack.c.b16 %v757, %v756
          %v770 = vpack.c.b16 %v759, %v758
          %v771 = vpack.c.b16 %v761, %v760
          %v772 = vpack.c.b16 %v763, %v762
          %v773 = vpack.c.b16 %v765, %v764
          %782 = vmatprep.subr.bf16.mxu0 0
          %783 = vmatpush1.bf16.msra.mxu0 %v766
          %784 = vmatprep.subr.bf16.mxu0 0
          %785 = vmatpush1.bf16.msra.mxu0 %v767
          %786 = vmatprep.subr.bf16.mxu0 0
          %787 = vmatpush1.bf16.msra.mxu0 %v768
          %788 = vmatprep.subr.bf16.mxu0 0
          %789 = vmatpush1.bf16.msra.mxu0 %v769
          %790 = vmatprep.subr.bf16.mxu0 0
          %791 = vmatpush1.bf16.msra.mxu0 %v770
          %792 = vmatprep.subr.bf16.mxu0 0
          %793 = vmatpush1.bf16.msra.mxu0 %v771
          %794 = vmatprep.subr.bf16.mxu0 0
          %795 = vmatpush1.bf16.msra.mxu0 %v772
          %796 = vmatprep.subr.bf16.mxu0 0
          %797 = vmatpush1.bf16.msra.mxu0 %v773
          %798 = vmatprep.subr.bf16.mxu0 0
          %799 = vmatpush1.bf16.msra.mxu0 0
          %800 = vmatprep.subr.bf16.mxu0 0
          %801 = vmatpush1.bf16.msra.mxu0 0
          %802 = vmatprep.subr.bf16.mxu0 0
          %803 = vmatpush1.bf16.msra.mxu0 0
          %804 = vmatprep.subr.bf16.mxu0 0
          %805 = vmatpush1.bf16.msra.mxu0 0
          %806 = vmatprep.subr.bf16.mxu0 0
          %807 = vmatpush1.bf16.msra.mxu0 0
          %808 = vmatprep.subr.bf16.mxu0 0
          %809 = vmatpush1.bf16.msra.mxu0 0
          %810 = vmatprep.subr.bf16.mxu0 0
          %811 = vmatpush1.bf16.msra.mxu0 0
          %812 = vmatprep.subr.bf16.mxu0 0
          %813 = vmatpush1.bf16.msra.mxu0 0
          %814 = vmatprep.mubr.bf16.mxu0 0
          %815 = vmatmul.mubr.bf16.gmra.mrb[0].mxu0 %v703
          %v816 = vpop.f32.mrb[0].mxu0
          %v817 = vadd.f32 %v732, %v816
          %v818 = vpop.f32.mrb[0].mxu0
          %v819 = vpop.f32.mrb[0].mxu0
          %v820 = vadd.f32 %v732, %v819
          %v821 = vpop.f32.mrb[0].mxu0
          %822 = vmatprep.mubr.bf16.mxu0 0
          %823 = vmatmul.mubr.bf16.gmra.mrb[0].mxu0 %v704
          %v824 = vpop.f32.mrb[0].mxu0
          %v825 = vadd.f32 %v732, %v824
          %v826 = vpop.f32.mrb[0].mxu0
          %v827 = vpop.f32.mrb[0].mxu0
          %v828 = vadd.f32 %v732, %v827
          %v829 = vpop.f32.mrb[0].mxu0
          %830 = vmatprep.mubr.bf16.mxu0 0
          %831 = vmatmul.mubr.bf16.gmra.mrb[0].mxu0 %v705
          %v832 = vpop.f32.mrb[0].mxu0
          %v833 = vadd.f32 %v732, %v832
          %v834 = vpop.f32.mrb[0].mxu0
          %v835 = vpop.f32.mrb[0].mxu0
          %v836 = vadd.f32 %v732, %v835
          %v837 = vpop.f32.mrb[0].mxu0
          %838 = vmatprep.mubr.bf16.mxu0 0
          %839 = vmatmul.mubr.bf16.gmra.mrb[0].mxu0 %v706
          %v840 = vpop.f32.mrb[0].mxu0
          %v841 = vadd.f32 %v732, %v840
          %v842 = vpop.f32.mrb[0].mxu0
          %v843 = vpop.f32.mrb[0].mxu0
          %v844 = vadd.f32 %v732, %v843
          %v845 = vpop.f32.mrb[0].mxu0
          %846 = vmatprep.mubr.bf16.mxu0 0
          %847 = vmatmul.mubr.bf16.gmra.mrb[0].mxu0 %v707
          %v848 = vpop.f32.mrb[0].mxu0
          %v849 = vadd.f32 %v732, %v848
          %v850 = vpop.f32.mrb[0].mxu0
          %v851 = vpop.f32.mrb[0].mxu0
          %v852 = vadd.f32 %v732, %v851
          %v853 = vpop.f32.mrb[0].mxu0
          %854 = vmatprep.mubr.bf16.mxu0 0
          %855 = vmatmul.mubr.bf16.gmra.mrb[0].mxu0 %v708
          %v856 = vpop.f32.mrb[0].mxu0
          %v857 = vadd.f32 %v732, %v856
          %v858 = vpop.f32.mrb[0].mxu0
          %v859 = vpop.f32.mrb[0].mxu0
          %v860 = vadd.f32 %v732, %v859
          %v861 = vpop.f32.mrb[0].mxu0
          %862 = vmatprep.mubr.bf16.mxu0 0
          %863 = vmatmul.mubr.bf16.gmra.mrb[0].mxu0 %v709
          %v864 = vpop.f32.mrb[0].mxu0
          %v865 = vadd.f32 %v732, %v864
          %v866 = vpop.f32.mrb[0].mxu0
          %v867 = vpop.f32.mrb[0].mxu0
          %v868 = vadd.f32 %v732, %v867
          %v869 = vpop.f32.mrb[0].mxu0
          %870 = vmatprep.mubr.bf16.mxu0 0
          %871 = vmatmul.mubr.bf16.gmra.mrb[0].mxu0 %v710
          %v872 = vpop.f32.mrb[0].mxu0
          %v873 = vadd.f32 %v732, %v872
          %v874 = vpop.f32.mrb[0].mxu0
          %v875 = vpop.f32.mrb[0].mxu0
          %v876 = vadd.f32 %v732, %v875
          %v877 = vpop.f32.mrb[0].mxu0
          %878 = vdwg.mxu0
          %v879 = vld [vmem:[%s381] sm:$0xff]
          %v880 = vld [vmem:[%s381 + $0x8] sm:$0xff]
          %v881 = vld [vmem:[%s381 + $0x10] sm:$0xff]
          %v882 = vld [vmem:[%s381 + $0x18] sm:$0xff]
          %v883 = vld [vmem:[%s381 + $0x20] sm:$0xff]
          %v884 = vld [vmem:[%s381 + $0x28] sm:$0xff]
          %v885 = vld [vmem:[%s381 + $0x30] sm:$0xff]
          %v886 = vld [vmem:[%s381 + $0x38] sm:$0xff]
          %v887 = vld [vmem:[%s381 + $0x40] sm:$0xff]
          %v888 = vld [vmem:[%s381 + $0x48] sm:$0xff]
          %v889 = vld [vmem:[%s381 + $0x50] sm:$0xff]
          %v890 = vld [vmem:[%s381 + $0x58] sm:$0xff]
          %v891 = vld [vmem:[%s381 + $0x60] sm:$0xff]
          %v892 = vld [vmem:[%s381 + $0x68] sm:$0xff]
          %v893 = vld [vmem:[%s381 + $0x70] sm:$0xff]
          %v894 = vld [vmem:[%s381 + $0x78] sm:$0xff]
          %vm895 = vcmp.ge.f32.partialorder %v817, 0.0
          %vm896 = vcmp.ge.f32.partialorder %v820, 0.0
          %vm897 = vcmp.ge.f32.partialorder %v825, 0.0
          %vm898 = vcmp.ge.f32.partialorder %v828, 0.0
          %vm899 = vcmp.ge.f32.partialorder %v833, 0.0
          %vm900 = vcmp.ge.f32.partialorder %v836, 0.0
          %vm901 = vcmp.ge.f32.partialorder %v841, 0.0
          %vm902 = vcmp.ge.f32.partialorder %v844, 0.0
          %vm903 = vcmp.ge.f32.partialorder %v849, 0.0
          %vm904 = vcmp.ge.f32.partialorder %v852, 0.0
          %vm905 = vcmp.ge.f32.partialorder %v857, 0.0
          %vm906 = vcmp.ge.f32.partialorder %v860, 0.0
          %vm907 = vcmp.ge.f32.partialorder %v865, 0.0
          %vm908 = vcmp.ge.f32.partialorder %v868, 0.0
          %vm909 = vcmp.ge.f32.partialorder %v873, 0.0
          %vm910 = vcmp.ge.f32.partialorder %v876, 0.0
          %v911 = vmul.f32 %v817, 0.1
          %v912 = vmul.f32 %v820, 0.1
          %v913 = vmul.f32 %v825, 0.1
          %v914 = vmul.f32 %v828, 0.1
          %v915 = vmul.f32 %v833, 0.1
          %v916 = vmul.f32 %v836, 0.1
          %v917 = vmul.f32 %v841, 0.1
          %v918 = vmul.f32 %v844, 0.1
          %v919 = vmul.f32 %v849, 0.1
          %v920 = vmul.f32 %v852, 0.1
          %v921 = vmul.f32 %v857, 0.1
          %v922 = vmul.f32 %v860, 0.1
          %v923 = vmul.f32 %v865, 0.1
          %v924 = vmul.f32 %v868, 0.1
          %v925 = vmul.f32 %v873, 0.1
          %v926 = vmul.f32 %v876, 0.1
          %v927 = vsel %vm895, %v817, %v911
          %v928 = vsel %vm896, %v820, %v912
          %v929 = vsel %vm897, %v825, %v913
          %v930 = vsel %vm898, %v828, %v914
          %v931 = vsel %vm899, %v833, %v915
          %v932 = vsel %vm900, %v836, %v916
          %v933 = vsel %vm901, %v841, %v917
          %v934 = vsel %vm902, %v844, %v918
          %v935 = vsel %vm903, %v849, %v919
          %v936 = vsel %vm904, %v852, %v920
          %v937 = vsel %vm905, %v857, %v921
          %v938 = vsel %vm906, %v860, %v922
          %v939 = vsel %vm907, %v865, %v923
          %v940 = vsel %vm908, %v868, %v924
          %v941 = vsel %vm909, %v873, %v925
          %v942 = vsel %vm910, %v876, %v926
          %v943 = vadd.f32 %v879, %v927
          %v944 = vadd.f32 %v880, %v928
          %v945 = vadd.f32 %v881, %v929
          %v946 = vadd.f32 %v882, %v930
          %v947 = vadd.f32 %v883, %v931
          %v948 = vadd.f32 %v884, %v932
          %v949 = vadd.f32 %v885, %v933
          %v950 = vadd.f32 %v886, %v934
          %v951 = vadd.f32 %v887, %v935
          %v952 = vadd.f32 %v888, %v936
          %v953 = vadd.f32 %v889, %v937
          %v954 = vadd.f32 %v890, %v938
          %v955 = vadd.f32 %v891, %v939
          %v956 = vadd.f32 %v892, %v940
          %v957 = vadd.f32 %v893, %v941
          %v958 = vadd.f32 %v894, %v942
          %959 = vst [vmem:[%s387] sm:$0xff] %v943
          %960 = vst [vmem:[%s387 + $0x8] sm:$0xff] %v944
          %961 = vst [vmem:[%s387 + $0x10] sm:$0xff] %v945
          %962 = vst [vmem:[%s387 + $0x18] sm:$0xff] %v946
          %963 = vst [vmem:[%s387 + $0x20] sm:$0xff] %v947
          %964 = vst [vmem:[%s387 + $0x28] sm:$0xff] %v948
          %965 = vst [vmem:[%s387 + $0x30] sm:$0xff] %v949
          %966 = vst [vmem:[%s387 + $0x38] sm:$0xff] %v950
          %967 = vst [vmem:[%s387 + $0x40] sm:$0xff] %v951
          %968 = vst [vmem:[%s387 + $0x48] sm:$0xff] %v952
          %969 = vst [vmem:[%s387 + $0x50] sm:$0xff] %v953
          %970 = vst [vmem:[%s387 + $0x58] sm:$0xff] %v954
          %971 = vst [vmem:[%s387 + $0x60] sm:$0xff] %v955
          %972 = vst [vmem:[%s387 + $0x68] sm:$0xff] %v956
          %973 = vst [vmem:[%s387 + $0x70] sm:$0xff] %v957
          %974 = vst [vmem:[%s387 + $0x78] sm:$0xff] %v958
        $region89: #{first_encoder_forward.5} parent=76 // pred_fallthru
          _
        %s975 = smul.u32 16, %s20
        %p976 = scmp.lt.s32.totalorder %s975, 31
        %s977 = scalar_select %p976, %s975, 31
        %s978 = smul.addr %s977, 8
        %s979 = scalar_lea.vmem %s5, %s978
        // Predicated region
        $region90: #{first_encoder_forward.5} parent=76 // pred_check
          %p980 = pneg %p168
        $region91: #{first_encoder_forward.5} parent=76 // pred_check_branch
          %982 = sbr.rel (%p980) target = $region93
        $region92: #{first_encoder_forward.5} parent=76 // pred_region
          %s983 = smul.u32 16, %s20
        $region93: #{first_encoder_forward.5} parent=76 // pred_fallthru
          _
      $region77: #{first_encoder_forward.5} parent=5 // pred_fallthru
        _
      %p984 = scmp.le.s32.totalorder 2, %s11
      // Predicated region
      $region94: #{first_encoder_forward.5} parent=5 // pred_check
        %p985 = pneg %p984
      $region95: #{first_encoder_forward.5} parent=5 // pred_check_branch
        %987 = sbr.rel (%p985) target = $region97
      $region96: #{first_encoder_forward.5} parent=5 // pred_region
        %s988 = ssub.s32 %s11, 2
        // Predicated region
        $region98: #{first_encoder_forward.5} parent=96 // pred_check
          %p989 = pneg %p174
        $region99: #{first_encoder_forward.5} parent=96 // pred_check_branch
          %991 = sbr.rel (%p989) target = $region101
        $region100: #{first_encoder_forward.5} parent=96 // pred_region
          %s992 = smul.u32 16, %s22
          %p993 = scmp.lt.s32.totalorder %s992, 31
          %s994 = scalar_select %p993, %s992, 31
          %s995 = smul.addr %s994, 8
          %s996 = scalar_lea.vmem %s5, %s995
        $region101: #{first_encoder_forward.5} parent=96 // pred_fallthru
          _
      $region97: #{first_encoder_forward.5} parent=5 // pred_fallthru
        _
    $region6: #{first_encoder_forward.5} parent=1 // loop_footer
      %s15 = sadd.s32 1, %s11
    $region7: #{first_encoder_forward.5} parent=1 // loop_footer_branch
      %10 = sbr.rel target = $region3
    $region8: #{first_encoder_forward.5} parent=1 // loop_exit
      _

</llo_original>
